<compile_context>
chip_gen: v5e
topology: v5e:2x2
jax: 0.10.0
libtpu: 0.0.40
codegen_flags: <defaults>
</compile_context>

<pallas_src>
import jax
import jax.numpy as jnp
from jax.experimental import pallas as pl
from jax.experimental.pallas import tpu as pltpu

D_MODEL = 32
N_HEADS = 4
D_FF = 64
HEAD_DIM = D_MODEL // N_HEADS

# Row indices of the packed "vecs" slab (each row zero-padded to VEC_W lanes).
VEC_W = 128
(_BQKV, _BO, _LN1G, _LN1B, _F1B1, _F1B2, _LN2G, _LN2B,
 _F2B1, _F2B2, _LN3G, _LN3B) = range(12)

PACKED_ORDER = ["wqkv", "wo", "w_in", "w_out", "vecs"]


def _layer_norm(h, g, b, eps=1e-5):
    mu = jnp.mean(h, axis=-1, keepdims=True)
    var = jnp.mean((h - mu) ** 2, axis=-1, keepdims=True)
    return (h - mu) * jax.lax.rsqrt(var + eps) * g + b


def encoder_layer_kernel(x_ref, wqkv_ref, wo_ref, w_in_ref, w_out_ref,
                         vecs_ref, o_ref):
    f32 = jnp.float32
    bt, S, D = x_ref.shape
    H, HD = N_HEADS, HEAD_DIM
    rows = bt * S

    x = x_ref[...].astype(f32).reshape(rows, D)

    # ---- bias / LayerNorm slab: read once, slice into named vectors ----
    vecs = vecs_ref[...].astype(f32)
    b_qkv = vecs[_BQKV:_BQKV + 1, :3 * D]
    b_o = vecs[_BO:_BO + 1, :D]
    ln1_g, ln1_b = vecs[_LN1G:_LN1G + 1, :D], vecs[_LN1B:_LN1B + 1, :D]
    f1_b1, f1_b2 = vecs[_F1B1:_F1B1 + 1, :D_FF], vecs[_F1B2:_F1B2 + 1, :D]
    ln2_g, ln2_b = vecs[_LN2G:_LN2G + 1, :D], vecs[_LN2B:_LN2B + 1, :D]
    f2_b1, f2_b2 = vecs[_F2B1:_F2B1 + 1, :D_FF], vecs[_F2B2:_F2B2 + 1, :D]
    ln3_g, ln3_b = vecs[_LN3G:_LN3G + 1, :D], vecs[_LN3B:_LN3B + 1, :D]

    # ---- fused QKV projection: one 32-deep, 96-lane-wide MXU matmul ----
    # (1/sqrt(head_dim) already folded into the Q columns / Q bias.)
    qkv = jnp.dot(x, wqkv_ref[...].astype(f32),
                  preferred_element_type=f32) + b_qkv            # (rows, 3D)

    # ---- per-batch, per-head attention (no cross-batch mask needed) ----
    # Scores / P@V are inherently head_dim(=8)-deep; batch them over the `bt`
    # batch elements of this block and unroll the tiny H=4 head loop.
    o_heads = []
    for hd in range(H):
        q = qkv[:, hd * HD:(hd + 1) * HD].reshape(bt, S, HD)
        k = qkv[:, D + hd * HD:D + (hd + 1) * HD].reshape(bt, S, HD)
        v = qkv[:, 2 * D + hd * HD:2 * D + (hd + 1) * HD].reshape(bt, S, HD)
        s = jnp.einsum("bqd,bkd->bqk", q, k, preferred_element_type=f32)
        s = s - jnp.max(s, axis=-1, keepdims=True)
        p = jnp.exp(s)
        p = p * pl.reciprocal(jnp.sum(p, axis=-1, keepdims=True), approx=False)
        o_heads.append(
            jnp.einsum("bqk,bkd->bqd", p, v,
                       preferred_element_type=f32).reshape(rows, HD))
    o = jnp.concatenate(o_heads, axis=-1)                        # (rows, D)

    # ---- single 32-deep out-projection over lane-concatenated heads ----
    attn = jnp.dot(o, wo_ref[...].astype(f32),
                   preferred_element_type=f32) + b_o
    # dropout_attn: identity (eval mode)
    h = _layer_norm(x + attn, ln1_g, ln1_b)

    # ---- feed-forward 1: Linear -> ReLU -> [dropout] -> Linear ----
    ff = jnp.maximum(
        jnp.dot(h, w_in_ref[0].astype(f32), preferred_element_type=f32)
        + f1_b1, 0.0)
    ff = jnp.dot(ff, w_out_ref[0].astype(f32),
                 preferred_element_type=f32) + f1_b2
    h = _layer_norm(h + ff, ln2_g, ln2_b)

    # ---- feed-forward 2 ----
    ff = jnp.maximum(
        jnp.dot(h, w_in_ref[1].astype(f32), preferred_element_type=f32)
        + f2_b1, 0.0)
    ff = jnp.dot(ff, w_out_ref[1].astype(f32),
                 preferred_element_type=f32) + f2_b2
    h = _layer_norm(h + ff, ln3_g, ln3_b)

    o_ref[...] = h.reshape(bt, S, D).astype(o_ref.dtype)


def encoder_layer(x, packed, *, batch_tile=None):
    """x: (B, S, D_MODEL).  `packed` from pack_params().

    The grid iterates over batch tiles of `batch_tile` batch elements
    (~512 rows per step by default) so BlockSpec pipelines the x / output
    DMAs; attention is computed per batch element inside each step.
    """
    B, S, D = x.shape
    assert D == D_MODEL
    if batch_tile is None:
        # ~512 rows per grid step for good DMA/compute pipelining; a single
        # step for small problems (avoids per-step overhead on 1-TC parts).
        batch_tile = min(B, max(1, 512 // max(S, 1)))
        while B % batch_tile:
            batch_tile -= 1
    assert B % batch_tile == 0

    params = [packed[k] for k in PACKED_ORDER]

    def full_spec(a):
        nd = a.ndim
        return pl.BlockSpec(a.shape, lambda i, _nd=nd: (0,) * _nd)

    out = pl.pallas_call(
        encoder_layer_kernel,
        out_shape=jax.ShapeDtypeStruct((B, S, D), x.dtype),
        grid=(B // batch_tile,),
        in_specs=[pl.BlockSpec((batch_tile, S, D), lambda i: (i, 0, 0))]
                 + [full_spec(p) for p in params],
        out_specs=pl.BlockSpec((batch_tile, S, D), lambda i: (i, 0, 0)),
        compiler_params=pltpu.CompilerParams(
            # Batch-tile axis is embarrassingly parallel (sharded across
            # TensorCores on multi-TC parts); there is no reduction axis.
            dimension_semantics=("parallel",)),
    )(x, *params)
    return out


def pack_params(p):
    """One-time packing of the 18 PyTorch-style parameters into 5 slabs."""
    scale = 1.0 / (HEAD_DIM ** 0.5)
    D = D_MODEL

    # Fold 1/sqrt(head_dim) into the Q projection weights and bias.
    wqkv = jnp.concatenate([p["wqkv_t"][:, :D] * scale, p["wqkv_t"][:, D:]],
                           axis=1)                               # (D, 3D)
    bflat = p["bqkv"].reshape(3 * D)
    bqkv = jnp.concatenate([bflat[:D] * scale, bflat[D:]])       # (3D,)

    w_in = jnp.stack([p["f1w1_t"], p["f2w1_t"]])                 # (2, D, D_FF)
    w_out = jnp.stack([p["f1w2_t"], p["f2w2_t"]])                # (2, D_FF, D)

    def row(v):
        v = jnp.asarray(v, jnp.float32).reshape(-1)
        return jnp.pad(v, (0, VEC_W - v.shape[0]))

    vecs = jnp.stack([
        row(bqkv), row(p["bo"]),
        row(p["ln1_g"]), row(p["ln1_b"]),
        row(p["f1b1"]), row(p["f1b2"]), row(p["ln2_g"]), row(p["ln2_b"]),
        row(p["f2b1"]), row(p["f2b2"]), row(p["ln3_g"]), row(p["ln3_b"]),
    ])                                                           # (12, 128)

    return {"wqkv": wqkv, "wo": p["wo_t"], "w_in": w_in, "w_out": w_out,
            "vecs": vecs}


def init_params(key):
    ks = jax.random.split(key, 18)

    def w(k, shape, scale=0.05):
        return jax.random.normal(k, shape, jnp.float32) * scale

    p = {}
    # nn.MultiheadAttention: in_proj_weight (3D, D), out_proj (D, D) -> transposed
    p["wqkv_t"] = w(ks[0], (D_MODEL, 3 * D_MODEL))
    p["bqkv"]   = w(ks[1], (1, 3 * D_MODEL))
    p["wo_t"]   = w(ks[2], (D_MODEL, D_MODEL))
    p["bo"]     = w(ks[3], (1, D_MODEL))
    p["ln1_g"]  = 1.0 + w(ks[4], (1, D_MODEL), 0.1)
    p["ln1_b"]  = w(ks[5], (1, D_MODEL), 0.1)
    p["ln2_g"]  = 1.0 + w(ks[6], (1, D_MODEL), 0.1)
    p["ln2_b"]  = w(ks[7], (1, D_MODEL), 0.1)
    p["ln3_g"]  = 1.0 + w(ks[8], (1, D_MODEL), 0.1)
    p["ln3_b"]  = w(ks[9], (1, D_MODEL), 0.1)
    p["f1w1_t"] = w(ks[10], (D_MODEL, D_FF))
    p["f1b1"]   = w(ks[11], (1, D_FF))
    p["f1w2_t"] = w(ks[12], (D_FF, D_MODEL))
    p["f1b2"]   = w(ks[13], (1, D_MODEL))
    p["f2w1_t"] = w(ks[14], (D_MODEL, D_FF))
    p["f2b1"]   = w(ks[15], (1, D_FF))
    p["f2w2_t"] = w(ks[16], (D_FF, D_MODEL))
    p["f2b2"]   = w(ks[17], (1, D_MODEL))
    return p


def reference(x, p):
    """Pure-JAX reference mirroring the PyTorch forward (eval mode)."""
    B, S, D = x.shape
    qkv = x @ p["wqkv_t"] + p["bqkv"][0]
    q = qkv[..., :D].reshape(B, S, N_HEADS, HEAD_DIM)
    k = qkv[..., D:2 * D].reshape(B, S, N_HEADS, HEAD_DIM)
    v = qkv[..., 2 * D:].reshape(B, S, N_HEADS, HEAD_DIM)
    scale = 1.0 / (HEAD_DIM ** 0.5)
    s = jnp.einsum("bqhd,bkhd->bhqk", q * scale, k)
    a = jax.nn.softmax(s, axis=-1)
    o = jnp.einsum("bhqk,bkhd->bqhd", a, v).reshape(B, S, D)
    attn = o @ p["wo_t"] + p["bo"][0]

    def ln(h, g, b, eps=1e-5):
        mu = jnp.mean(h, axis=-1, keepdims=True)
        var = jnp.mean((h - mu) ** 2, axis=-1, keepdims=True)
        return (h - mu) * jax.lax.rsqrt(var + eps) * g[0] + b[0]

    x = ln(x + attn, p["ln1_g"], p["ln1_b"])
    ff1 = jnp.maximum(x @ p["f1w1_t"] + p["f1b1"][0], 0.0) @ p["f1w2_t"] + p["f1b2"][0]
    x = ln(x + ff1, p["ln2_g"], p["ln2_b"])
    ff2 = jnp.maximum(x @ p["f2w1_t"] + p["f2b1"][0], 0.0) @ p["f2w2_t"] + p["f2b2"][0]
    x = ln(x + ff2, p["ln3_g"], p["ln3_b"])
    return x


if __name__ == "__main__":
    key = jax.random.PRNGKey(0)
    kx, kp = jax.random.split(key)
    B, S = 2, 8
    x = jax.random.normal(kx, (B, S, D_MODEL), jnp.float32)
    params = init_params(kp)
    packed = pack_params(params)          # one-time parameter packing
    ref = reference(x, params)

    # Default: one grid step holds the whole (tiny) batch.
    out = jax.block_until_ready(encoder_layer(x, packed))
    assert out.shape == (B, S, D_MODEL)
    assert jnp.allclose(out, ref, atol=1e-4, rtol=1e-4), "mismatch (default tile)"

    # Also exercise the tiled / pipelined grid path (one batch per step).
    out_tiled = jax.block_until_ready(encoder_layer(x, packed, batch_tile=1))
    assert jnp.allclose(out_tiled, ref, atol=1e-4, rtol=1e-4), "mismatch (batch_tile=1)"

    print("KERNEL_OK")
</pallas_src>

<mosaic_0001>
module attributes {stable_mosaic.version = 11 : i64} {
  func.func @encoder_layer_kernel(%arg0: i32, %arg1: memref<2x8x32xf32, #tpu.memory_space<vmem>>, %arg2: memref<32x96xf32, #tpu.memory_space<vmem>>, %arg3: memref<32x32xf32, #tpu.memory_space<vmem>>, %arg4: memref<2x32x64xf32, #tpu.memory_space<vmem>>, %arg5: memref<2x64x32xf32, #tpu.memory_space<vmem>>, %arg6: memref<12x128xf32, #tpu.memory_space<vmem>>, %arg7: memref<2x8x32xf32, #tpu.memory_space<vmem>>) attributes {dimension_semantics = [#tpu.dimension_semantics<parallel>], iteration_bounds = array<i64: 1>, scalar_prefetch = 0 : i64, scratch_operands = 0 : i64, tpu.core_type = #tpu.core_type<tc>, window_params = [{transform_indices = @transform_0, window_bounds = array<i64: 2, 8, 32>}, {pipeline_mode = #tpu.pipeline_mode<synchronous>, transform_indices = @transform_1, window_bounds = array<i64: 32, 96>}, {pipeline_mode = #tpu.pipeline_mode<synchronous>, transform_indices = @transform_2, window_bounds = array<i64: 32, 32>}, {pipeline_mode = #tpu.pipeline_mode<synchronous>, transform_indices = @transform_3, window_bounds = array<i64: 2, 32, 64>}, {pipeline_mode = #tpu.pipeline_mode<synchronous>, transform_indices = @transform_4, window_bounds = array<i64: 2, 64, 32>}, {pipeline_mode = #tpu.pipeline_mode<synchronous>, transform_indices = @transform_5, window_bounds = array<i64: 12, 128>}, {transform_indices = @transform_6, window_bounds = array<i64: 2, 8, 32>}]} {
    %c0 = arith.constant 0 : index
    %c0_0 = arith.constant 0 : index
    %c0_1 = arith.constant 0 : index
    %0 = vector.load %arg1[%c0, %c0_0, %c0_1] : memref<2x8x32xf32, #tpu.memory_space<vmem>>, vector<2x8x32xf32>
    %1 = vector.shape_cast %0 : vector<2x8x32xf32> to vector<16x32xf32>
    %c0_2 = arith.constant 0 : index
    %c0_3 = arith.constant 0 : index
    %2 = vector.load %arg6[%c0_2, %c0_3] : memref<12x128xf32, #tpu.memory_space<vmem>>, vector<12x128xf32>
    %3 = vector.extract_strided_slice %2 {offsets = [0, 0], sizes = [1, 96], strides = [1, 1]} : vector<12x128xf32> to vector<1x96xf32>
    %4 = vector.extract_strided_slice %2 {offsets = [1, 0], sizes = [1, 32], strides = [1, 1]} : vector<12x128xf32> to vector<1x32xf32>
    %5 = vector.extract_strided_slice %2 {offsets = [2, 0], sizes = [1, 32], strides = [1, 1]} : vector<12x128xf32> to vector<1x32xf32>
    %6 = vector.extract_strided_slice %2 {offsets = [3, 0], sizes = [1, 32], strides = [1, 1]} : vector<12x128xf32> to vector<1x32xf32>
    %7 = vector.extract_strided_slice %2 {offsets = [4, 0], sizes = [1, 64], strides = [1, 1]} : vector<12x128xf32> to vector<1x64xf32>
    %8 = vector.extract_strided_slice %2 {offsets = [5, 0], sizes = [1, 32], strides = [1, 1]} : vector<12x128xf32> to vector<1x32xf32>
    %9 = vector.extract_strided_slice %2 {offsets = [6, 0], sizes = [1, 32], strides = [1, 1]} : vector<12x128xf32> to vector<1x32xf32>
    %10 = vector.extract_strided_slice %2 {offsets = [7, 0], sizes = [1, 32], strides = [1, 1]} : vector<12x128xf32> to vector<1x32xf32>
    %11 = vector.extract_strided_slice %2 {offsets = [8, 0], sizes = [1, 64], strides = [1, 1]} : vector<12x128xf32> to vector<1x64xf32>
    %12 = vector.extract_strided_slice %2 {offsets = [9, 0], sizes = [1, 32], strides = [1, 1]} : vector<12x128xf32> to vector<1x32xf32>
    %13 = vector.extract_strided_slice %2 {offsets = [10, 0], sizes = [1, 32], strides = [1, 1]} : vector<12x128xf32> to vector<1x32xf32>
    %14 = vector.extract_strided_slice %2 {offsets = [11, 0], sizes = [1, 32], strides = [1, 1]} : vector<12x128xf32> to vector<1x32xf32>
    %c0_4 = arith.constant 0 : index
    %c0_5 = arith.constant 0 : index
    %15 = vector.load %arg2[%c0_4, %c0_5] : memref<32x96xf32, #tpu.memory_space<vmem>>, vector<32x96xf32>
    %cst = arith.constant dense<0.000000e+00> : vector<16x96xf32>
    %16 = tpu.matmul %1, %15, %cst {dimension_numbers = #tpu.dot_dimension_numbers<[1], [0], [0], [1], [0, 0, 1, 1], [], []>} : vector<16x32xf32>, vector<32x96xf32>, vector<16x96xf32> -> vector<16x96xf32>
    %17 = vector.broadcast %3 : vector<1x96xf32> to vector<16x96xf32>
    %18 = arith.addf %16, %17 : vector<16x96xf32>
    %19 = vector.extract_strided_slice %18 {offsets = [0, 0], sizes = [16, 8], strides = [1, 1]} : vector<16x96xf32> to vector<16x8xf32>
    %20 = vector.shape_cast %19 : vector<16x8xf32> to vector<2x8x8xf32>
    %21 = vector.extract_strided_slice %18 {offsets = [0, 32], sizes = [16, 8], strides = [1, 1]} : vector<16x96xf32> to vector<16x8xf32>
    %22 = vector.shape_cast %21 : vector<16x8xf32> to vector<2x8x8xf32>
    %23 = vector.extract_strided_slice %18 {offsets = [0, 64], sizes = [16, 8], strides = [1, 1]} : vector<16x96xf32> to vector<16x8xf32>
    %24 = vector.shape_cast %23 : vector<16x8xf32> to vector<2x8x8xf32>
    "tpu.trace_start"() <{level = 10 : i32, message = "bqd,bkd->bqk"}> : () -> ()
    %cst_6 = arith.constant dense<0.000000e+00> : vector<2x8x8xf32>
    %25 = tpu.matmul %20, %22, %cst_6 {dimension_numbers = #tpu.dot_dimension_numbers<[2], [2], [1], [1], [0, 0, 0, 1, 1, 1], [0], [0]>} : vector<2x8x8xf32>, vector<2x8x8xf32>, vector<2x8x8xf32> -> vector<2x8x8xf32>
    "tpu.trace_stop"() : () -> ()
    %cst_7 = arith.constant dense<0xFF800000> : vector<2x8xf32>
    %26 = vector.multi_reduction <maximumf>, %25, %cst_7 [2] : vector<2x8x8xf32> to vector<2x8xf32>
    %27 = vector.shape_cast %26 : vector<2x8xf32> to vector<2x8x1xf32>
    %28 = vector.broadcast %27 : vector<2x8x1xf32> to vector<2x8x8xf32>
    %29 = arith.subf %25, %28 : vector<2x8x8xf32>
    %30 = math.exp %29 : vector<2x8x8xf32>
    %cst_8 = arith.constant dense<0.000000e+00> : vector<2x8xf32>
    %31 = vector.multi_reduction <add>, %30, %cst_8 [2] : vector<2x8x8xf32> to vector<2x8xf32>
    %32 = vector.shape_cast %31 : vector<2x8xf32> to vector<2x8x1xf32>
    %33 = tpu.reciprocal %32 : vector<2x8x1xf32> -> vector<2x8x1xf32>
    %34 = vector.broadcast %33 : vector<2x8x1xf32> to vector<2x8x8xf32>
    %35 = arith.mulf %30, %34 : vector<2x8x8xf32>
    "tpu.trace_start"() <{level = 10 : i32, message = "bqk,bkd->bqd"}> : () -> ()
    %cst_9 = arith.constant dense<0.000000e+00> : vector<2x8x8xf32>
    %36 = tpu.matmul %35, %24, %cst_9 {dimension_numbers = #tpu.dot_dimension_numbers<[2], [1], [1], [2], [0, 0, 0, 1, 1, 2], [0], [0]>} : vector<2x8x8xf32>, vector<2x8x8xf32>, vector<2x8x8xf32> -> vector<2x8x8xf32>
    "tpu.trace_stop"() : () -> ()
    %37 = vector.shape_cast %36 : vector<2x8x8xf32> to vector<16x8xf32>
    %38 = vector.extract_strided_slice %18 {offsets = [0, 8], sizes = [16, 8], strides = [1, 1]} : vector<16x96xf32> to vector<16x8xf32>
    %39 = vector.shape_cast %38 : vector<16x8xf32> to vector<2x8x8xf32>
    %40 = vector.extract_strided_slice %18 {offsets = [0, 40], sizes = [16, 8], strides = [1, 1]} : vector<16x96xf32> to vector<16x8xf32>
    %41 = vector.shape_cast %40 : vector<16x8xf32> to vector<2x8x8xf32>
    %42 = vector.extract_strided_slice %18 {offsets = [0, 72], sizes = [16, 8], strides = [1, 1]} : vector<16x96xf32> to vector<16x8xf32>
    %43 = vector.shape_cast %42 : vector<16x8xf32> to vector<2x8x8xf32>
    "tpu.trace_start"() <{level = 10 : i32, message = "bqd,bkd->bqk"}> : () -> ()
    %cst_10 = arith.constant dense<0.000000e+00> : vector<2x8x8xf32>
    %44 = tpu.matmul %39, %41, %cst_10 {dimension_numbers = #tpu.dot_dimension_numbers<[2], [2], [1], [1], [0, 0, 0, 1, 1, 1], [0], [0]>} : vector<2x8x8xf32>, vector<2x8x8xf32>, vector<2x8x8xf32> -> vector<2x8x8xf32>
    "tpu.trace_stop"() : () -> ()
    %cst_11 = arith.constant dense<0xFF800000> : vector<2x8xf32>
    %45 = vector.multi_reduction <maximumf>, %44, %cst_11 [2] : vector<2x8x8xf32> to vector<2x8xf32>
    %46 = vector.shape_cast %45 : vector<2x8xf32> to vector<2x8x1xf32>
    %47 = vector.broadcast %46 : vector<2x8x1xf32> to vector<2x8x8xf32>
    %48 = arith.subf %44, %47 : vector<2x8x8xf32>
    %49 = math.exp %48 : vector<2x8x8xf32>
    %cst_12 = arith.constant dense<0.000000e+00> : vector<2x8xf32>
    %50 = vector.multi_reduction <add>, %49, %cst_12 [2] : vector<2x8x8xf32> to vector<2x8xf32>
    %51 = vector.shape_cast %50 : vector<2x8xf32> to vector<2x8x1xf32>
    %52 = tpu.reciprocal %51 : vector<2x8x1xf32> -> vector<2x8x1xf32>
    %53 = vector.broadcast %52 : vector<2x8x1xf32> to vector<2x8x8xf32>
    %54 = arith.mulf %49, %53 : vector<2x8x8xf32>
    "tpu.trace_start"() <{level = 10 : i32, message = "bqk,bkd->bqd"}> : () -> ()
    %cst_13 = arith.constant dense<0.000000e+00> : vector<2x8x8xf32>
    %55 = tpu.matmul %54, %43, %cst_13 {dimension_numbers = #tpu.dot_dimension_numbers<[2], [1], [1], [2], [0, 0, 0, 1, 1, 2], [0], [0]>} : vector<2x8x8xf32>, vector<2x8x8xf32>, vector<2x8x8xf32> -> vector<2x8x8xf32>
    "tpu.trace_stop"() : () -> ()
    %56 = vector.shape_cast %55 : vector<2x8x8xf32> to vector<16x8xf32>
    %57 = vector.extract_strided_slice %18 {offsets = [0, 16], sizes = [16, 8], strides = [1, 1]} : vector<16x96xf32> to vector<16x8xf32>
    %58 = vector.shape_cast %57 : vector<16x8xf32> to vector<2x8x8xf32>
    %59 = vector.extract_strided_slice %18 {offsets = [0, 48], sizes = [16, 8], strides = [1, 1]} : vector<16x96xf32> to vector<16x8xf32>
    %60 = vector.shape_cast %59 : vector<16x8xf32> to vector<2x8x8xf32>
    %61 = vector.extract_strided_slice %18 {offsets = [0, 80], sizes = [16, 8], strides = [1, 1]} : vector<16x96xf32> to vector<16x8xf32>
    %62 = vector.shape_cast %61 : vector<16x8xf32> to vector<2x8x8xf32>
    "tpu.trace_start"() <{level = 10 : i32, message = "bqd,bkd->bqk"}> : () -> ()
    %cst_14 = arith.constant dense<0.000000e+00> : vector<2x8x8xf32>
    %63 = tpu.matmul %58, %60, %cst_14 {dimension_numbers = #tpu.dot_dimension_numbers<[2], [2], [1], [1], [0, 0, 0, 1, 1, 1], [0], [0]>} : vector<2x8x8xf32>, vector<2x8x8xf32>, vector<2x8x8xf32> -> vector<2x8x8xf32>
    "tpu.trace_stop"() : () -> ()
    %cst_15 = arith.constant dense<0xFF800000> : vector<2x8xf32>
    %64 = vector.multi_reduction <maximumf>, %63, %cst_15 [2] : vector<2x8x8xf32> to vector<2x8xf32>
    %65 = vector.shape_cast %64 : vector<2x8xf32> to vector<2x8x1xf32>
    %66 = vector.broadcast %65 : vector<2x8x1xf32> to vector<2x8x8xf32>
    %67 = arith.subf %63, %66 : vector<2x8x8xf32>
    %68 = math.exp %67 : vector<2x8x8xf32>
    %cst_16 = arith.constant dense<0.000000e+00> : vector<2x8xf32>
    %69 = vector.multi_reduction <add>, %68, %cst_16 [2] : vector<2x8x8xf32> to vector<2x8xf32>
    %70 = vector.shape_cast %69 : vector<2x8xf32> to vector<2x8x1xf32>
    %71 = tpu.reciprocal %70 : vector<2x8x1xf32> -> vector<2x8x1xf32>
    %72 = vector.broadcast %71 : vector<2x8x1xf32> to vector<2x8x8xf32>
    %73 = arith.mulf %68, %72 : vector<2x8x8xf32>
    "tpu.trace_start"() <{level = 10 : i32, message = "bqk,bkd->bqd"}> : () -> ()
    %cst_17 = arith.constant dense<0.000000e+00> : vector<2x8x8xf32>
    %74 = tpu.matmul %73, %62, %cst_17 {dimension_numbers = #tpu.dot_dimension_numbers<[2], [1], [1], [2], [0, 0, 0, 1, 1, 2], [0], [0]>} : vector<2x8x8xf32>, vector<2x8x8xf32>, vector<2x8x8xf32> -> vector<2x8x8xf32>
    "tpu.trace_stop"() : () -> ()
    %75 = vector.shape_cast %74 : vector<2x8x8xf32> to vector<16x8xf32>
    %76 = vector.extract_strided_slice %18 {offsets = [0, 24], sizes = [16, 8], strides = [1, 1]} : vector<16x96xf32> to vector<16x8xf32>
    %77 = vector.shape_cast %76 : vector<16x8xf32> to vector<2x8x8xf32>
    %78 = vector.extract_strided_slice %18 {offsets = [0, 56], sizes = [16, 8], strides = [1, 1]} : vector<16x96xf32> to vector<16x8xf32>
    %79 = vector.shape_cast %78 : vector<16x8xf32> to vector<2x8x8xf32>
    %80 = vector.extract_strided_slice %18 {offsets = [0, 88], sizes = [16, 8], strides = [1, 1]} : vector<16x96xf32> to vector<16x8xf32>
    %81 = vector.shape_cast %80 : vector<16x8xf32> to vector<2x8x8xf32>
    "tpu.trace_start"() <{level = 10 : i32, message = "bqd,bkd->bqk"}> : () -> ()
    %cst_18 = arith.constant dense<0.000000e+00> : vector<2x8x8xf32>
    %82 = tpu.matmul %77, %79, %cst_18 {dimension_numbers = #tpu.dot_dimension_numbers<[2], [2], [1], [1], [0, 0, 0, 1, 1, 1], [0], [0]>} : vector<2x8x8xf32>, vector<2x8x8xf32>, vector<2x8x8xf32> -> vector<2x8x8xf32>
    "tpu.trace_stop"() : () -> ()
    %cst_19 = arith.constant dense<0xFF800000> : vector<2x8xf32>
    %83 = vector.multi_reduction <maximumf>, %82, %cst_19 [2] : vector<2x8x8xf32> to vector<2x8xf32>
    %84 = vector.shape_cast %83 : vector<2x8xf32> to vector<2x8x1xf32>
    %85 = vector.broadcast %84 : vector<2x8x1xf32> to vector<2x8x8xf32>
    %86 = arith.subf %82, %85 : vector<2x8x8xf32>
    %87 = math.exp %86 : vector<2x8x8xf32>
    %cst_20 = arith.constant dense<0.000000e+00> : vector<2x8xf32>
    %88 = vector.multi_reduction <add>, %87, %cst_20 [2] : vector<2x8x8xf32> to vector<2x8xf32>
    %89 = vector.shape_cast %88 : vector<2x8xf32> to vector<2x8x1xf32>
    %90 = tpu.reciprocal %89 : vector<2x8x1xf32> -> vector<2x8x1xf32>
    %91 = vector.broadcast %90 : vector<2x8x1xf32> to vector<2x8x8xf32>
    %92 = arith.mulf %87, %91 : vector<2x8x8xf32>
    "tpu.trace_start"() <{level = 10 : i32, message = "bqk,bkd->bqd"}> : () -> ()
    %cst_21 = arith.constant dense<0.000000e+00> : vector<2x8x8xf32>
    %93 = tpu.matmul %92, %81, %cst_21 {dimension_numbers = #tpu.dot_dimension_numbers<[2], [1], [1], [2], [0, 0, 0, 1, 1, 2], [0], [0]>} : vector<2x8x8xf32>, vector<2x8x8xf32>, vector<2x8x8xf32> -> vector<2x8x8xf32>
    "tpu.trace_stop"() : () -> ()
    %94 = vector.shape_cast %93 : vector<2x8x8xf32> to vector<16x8xf32>
    %95 = tpu.concatenate %37, %56, %75, %94 in 1 : vector<16x8xf32>, vector<16x8xf32>, vector<16x8xf32>, vector<16x8xf32> -> vector<16x32xf32>
    %c0_22 = arith.constant 0 : index
    %c0_23 = arith.constant 0 : index
    %96 = vector.load %arg3[%c0_22, %c0_23] : memref<32x32xf32, #tpu.memory_space<vmem>>, vector<32x32xf32>
    %cst_24 = arith.constant dense<0.000000e+00> : vector<16x32xf32>
    %97 = tpu.matmul %95, %96, %cst_24 {dimension_numbers = #tpu.dot_dimension_numbers<[1], [0], [0], [1], [0, 0, 1, 1], [], []>} : vector<16x32xf32>, vector<32x32xf32>, vector<16x32xf32> -> vector<16x32xf32>
    %98 = vector.broadcast %4 : vector<1x32xf32> to vector<16x32xf32>
    %99 = arith.addf %97, %98 : vector<16x32xf32>
    %100 = arith.addf %1, %99 : vector<16x32xf32>
    %cst_25 = arith.constant dense<0.000000e+00> : vector<16xf32>
    %101 = vector.multi_reduction <add>, %100, %cst_25 [1] : vector<16x32xf32> to vector<16xf32>
    %102 = vector.shape_cast %101 : vector<16xf32> to vector<16x1xf32>
    %cst_26 = arith.constant 3.200000e+01 : f32
    %103 = vector.broadcast %cst_26 : f32 to vector<16x1xf32>
    %104 = arith.divf %102, %103 : vector<16x1xf32>
    %105 = vector.broadcast %104 : vector<16x1xf32> to vector<16x32xf32>
    %106 = arith.subf %100, %105 : vector<16x32xf32>
    %107 = arith.mulf %106, %106 : vector<16x32xf32>
    %cst_27 = arith.constant dense<0.000000e+00> : vector<16xf32>
    %108 = vector.multi_reduction <add>, %107, %cst_27 [1] : vector<16x32xf32> to vector<16xf32>
    %109 = vector.shape_cast %108 : vector<16xf32> to vector<16x1xf32>
    %cst_28 = arith.constant 3.200000e+01 : f32
    %110 = vector.broadcast %cst_28 : f32 to vector<16x1xf32>
    %111 = arith.divf %109, %110 : vector<16x1xf32>
    %112 = vector.broadcast %104 : vector<16x1xf32> to vector<16x32xf32>
    %113 = arith.subf %100, %112 : vector<16x32xf32>
    %cst_29 = arith.constant 9.99999974E-6 : f32
    %114 = vector.broadcast %cst_29 : f32 to vector<16x1xf32>
    %115 = arith.addf %111, %114 : vector<16x1xf32>
    %116 = math.rsqrt %115 : vector<16x1xf32>
    %117 = vector.broadcast %116 : vector<16x1xf32> to vector<16x32xf32>
    %118 = arith.mulf %113, %117 : vector<16x32xf32>
    %119 = vector.broadcast %5 : vector<1x32xf32> to vector<16x32xf32>
    %120 = arith.mulf %118, %119 : vector<16x32xf32>
    %121 = vector.broadcast %6 : vector<1x32xf32> to vector<16x32xf32>
    %122 = arith.addf %120, %121 : vector<16x32xf32>
    %c0_30 = arith.constant 0 : index
    %c0_31 = arith.constant 0 : index
    %c0_32 = arith.constant 0 : index
    %123 = vector.load %arg4[%c0_30, %c0_31, %c0_32] : memref<2x32x64xf32, #tpu.memory_space<vmem>>, vector<1x32x64xf32>
    %124 = vector.shape_cast %123 : vector<1x32x64xf32> to vector<32x64xf32>
    %cst_33 = arith.constant dense<0.000000e+00> : vector<16x64xf32>
    %125 = tpu.matmul %122, %124, %cst_33 {dimension_numbers = #tpu.dot_dimension_numbers<[1], [0], [0], [1], [0, 0, 1, 1], [], []>} : vector<16x32xf32>, vector<32x64xf32>, vector<16x64xf32> -> vector<16x64xf32>
    %126 = vector.broadcast %7 : vector<1x64xf32> to vector<16x64xf32>
    %127 = arith.addf %125, %126 : vector<16x64xf32>
    %cst_34 = arith.constant 0.000000e+00 : f32
    %128 = vector.broadcast %cst_34 : f32 to vector<16x64xf32>
    %129 = arith.maximumf %127, %128 : vector<16x64xf32>
    %c0_35 = arith.constant 0 : index
    %c0_36 = arith.constant 0 : index
    %c0_37 = arith.constant 0 : index
    %130 = vector.load %arg5[%c0_35, %c0_36, %c0_37] : memref<2x64x32xf32, #tpu.memory_space<vmem>>, vector<1x64x32xf32>
    %131 = vector.shape_cast %130 : vector<1x64x32xf32> to vector<64x32xf32>
    %cst_38 = arith.constant dense<0.000000e+00> : vector<16x32xf32>
    %132 = tpu.matmul %129, %131, %cst_38 {dimension_numbers = #tpu.dot_dimension_numbers<[1], [0], [0], [1], [0, 0, 1, 1], [], []>} : vector<16x64xf32>, vector<64x32xf32>, vector<16x32xf32> -> vector<16x32xf32>
    %133 = vector.broadcast %8 : vector<1x32xf32> to vector<16x32xf32>
    %134 = arith.addf %132, %133 : vector<16x32xf32>
    %135 = arith.addf %122, %134 : vector<16x32xf32>
    %cst_39 = arith.constant dense<0.000000e+00> : vector<16xf32>
    %136 = vector.multi_reduction <add>, %135, %cst_39 [1] : vector<16x32xf32> to vector<16xf32>
    %137 = vector.shape_cast %136 : vector<16xf32> to vector<16x1xf32>
    %cst_40 = arith.constant 3.200000e+01 : f32
    %138 = vector.broadcast %cst_40 : f32 to vector<16x1xf32>
    %139 = arith.divf %137, %138 : vector<16x1xf32>
    %140 = vector.broadcast %139 : vector<16x1xf32> to vector<16x32xf32>
    %141 = arith.subf %135, %140 : vector<16x32xf32>
    %142 = arith.mulf %141, %141 : vector<16x32xf32>
    %cst_41 = arith.constant dense<0.000000e+00> : vector<16xf32>
    %143 = vector.multi_reduction <add>, %142, %cst_41 [1] : vector<16x32xf32> to vector<16xf32>
    %144 = vector.shape_cast %143 : vector<16xf32> to vector<16x1xf32>
    %cst_42 = arith.constant 3.200000e+01 : f32
    %145 = vector.broadcast %cst_42 : f32 to vector<16x1xf32>
    %146 = arith.divf %144, %145 : vector<16x1xf32>
    %147 = vector.broadcast %139 : vector<16x1xf32> to vector<16x32xf32>
    %148 = arith.subf %135, %147 : vector<16x32xf32>
    %cst_43 = arith.constant 9.99999974E-6 : f32
    %149 = vector.broadcast %cst_43 : f32 to vector<16x1xf32>
    %150 = arith.addf %146, %149 : vector<16x1xf32>
    %151 = math.rsqrt %150 : vector<16x1xf32>
    %152 = vector.broadcast %151 : vector<16x1xf32> to vector<16x32xf32>
    %153 = arith.mulf %148, %152 : vector<16x32xf32>
    %154 = vector.broadcast %9 : vector<1x32xf32> to vector<16x32xf32>
    %155 = arith.mulf %153, %154 : vector<16x32xf32>
    %156 = vector.broadcast %10 : vector<1x32xf32> to vector<16x32xf32>
    %157 = arith.addf %155, %156 : vector<16x32xf32>
    %c1 = arith.constant 1 : index
    %c0_44 = arith.constant 0 : index
    %c0_45 = arith.constant 0 : index
    %158 = vector.load %arg4[%c1, %c0_44, %c0_45] : memref<2x32x64xf32, #tpu.memory_space<vmem>>, vector<1x32x64xf32>
    %159 = vector.shape_cast %158 : vector<1x32x64xf32> to vector<32x64xf32>
    %cst_46 = arith.constant dense<0.000000e+00> : vector<16x64xf32>
    %160 = tpu.matmul %157, %159, %cst_46 {dimension_numbers = #tpu.dot_dimension_numbers<[1], [0], [0], [1], [0, 0, 1, 1], [], []>} : vector<16x32xf32>, vector<32x64xf32>, vector<16x64xf32> -> vector<16x64xf32>
    %161 = vector.broadcast %11 : vector<1x64xf32> to vector<16x64xf32>
    %162 = arith.addf %160, %161 : vector<16x64xf32>
    %cst_47 = arith.constant 0.000000e+00 : f32
    %163 = vector.broadcast %cst_47 : f32 to vector<16x64xf32>
    %164 = arith.maximumf %162, %163 : vector<16x64xf32>
    %c1_48 = arith.constant 1 : index
    %c0_49 = arith.constant 0 : index
    %c0_50 = arith.constant 0 : index
    %165 = vector.load %arg5[%c1_48, %c0_49, %c0_50] : memref<2x64x32xf32, #tpu.memory_space<vmem>>, vector<1x64x32xf32>
    %166 = vector.shape_cast %165 : vector<1x64x32xf32> to vector<64x32xf32>
    %cst_51 = arith.constant dense<0.000000e+00> : vector<16x32xf32>
    %167 = tpu.matmul %164, %166, %cst_51 {dimension_numbers = #tpu.dot_dimension_numbers<[1], [0], [0], [1], [0, 0, 1, 1], [], []>} : vector<16x64xf32>, vector<64x32xf32>, vector<16x32xf32> -> vector<16x32xf32>
    %168 = vector.broadcast %12 : vector<1x32xf32> to vector<16x32xf32>
    %169 = arith.addf %167, %168 : vector<16x32xf32>
    %170 = arith.addf %157, %169 : vector<16x32xf32>
    %cst_52 = arith.constant dense<0.000000e+00> : vector<16xf32>
    %171 = vector.multi_reduction <add>, %170, %cst_52 [1] : vector<16x32xf32> to vector<16xf32>
    %172 = vector.shape_cast %171 : vector<16xf32> to vector<16x1xf32>
    %cst_53 = arith.constant 3.200000e+01 : f32
    %173 = vector.broadcast %cst_53 : f32 to vector<16x1xf32>
    %174 = arith.divf %172, %173 : vector<16x1xf32>
    %175 = vector.broadcast %174 : vector<16x1xf32> to vector<16x32xf32>
    %176 = arith.subf %170, %175 : vector<16x32xf32>
    %177 = arith.mulf %176, %176 : vector<16x32xf32>
    %cst_54 = arith.constant dense<0.000000e+00> : vector<16xf32>
    %178 = vector.multi_reduction <add>, %177, %cst_54 [1] : vector<16x32xf32> to vector<16xf32>
    %179 = vector.shape_cast %178 : vector<16xf32> to vector<16x1xf32>
    %cst_55 = arith.constant 3.200000e+01 : f32
    %180 = vector.broadcast %cst_55 : f32 to vector<16x1xf32>
    %181 = arith.divf %179, %180 : vector<16x1xf32>
    %182 = vector.broadcast %174 : vector<16x1xf32> to vector<16x32xf32>
    %183 = arith.subf %170, %182 : vector<16x32xf32>
    %cst_56 = arith.constant 9.99999974E-6 : f32
    %184 = vector.broadcast %cst_56 : f32 to vector<16x1xf32>
    %185 = arith.addf %181, %184 : vector<16x1xf32>
    %186 = math.rsqrt %185 : vector<16x1xf32>
    %187 = vector.broadcast %186 : vector<16x1xf32> to vector<16x32xf32>
    %188 = arith.mulf %183, %187 : vector<16x32xf32>
    %189 = vector.broadcast %13 : vector<1x32xf32> to vector<16x32xf32>
    %190 = arith.mulf %188, %189 : vector<16x32xf32>
    %191 = vector.broadcast %14 : vector<1x32xf32> to vector<16x32xf32>
    %192 = arith.addf %190, %191 : vector<16x32xf32>
    %193 = vector.shape_cast %192 : vector<16x32xf32> to vector<2x8x32xf32>
    %c0_57 = arith.constant 0 : index
    %c0_58 = arith.constant 0 : index
    %c0_59 = arith.constant 0 : index
    %194 = vector.load %arg7[%c0_57, %c0_58, %c0_59] : memref<2x8x32xf32, #tpu.memory_space<vmem>>, vector<2x8x32xf32>
    tpu.vector_store %arg7[%c0_57, %c0_58, %c0_59], %193 {strides = array<i32>} : memref<2x8x32xf32, #tpu.memory_space<vmem>>, vector<2x8x32xf32>,
    return
  }
  func.func @transform_0(%arg0: i32) -> (i32, i32, i32) {
    %c0_i32 = arith.constant 0 : i32
    %c0_i32_0 = arith.constant 0 : i32
    %c0_i32_1 = arith.constant 0 : i32
    return %arg0, %c0_i32, %c0_i32_0 : i32, i32, i32
  }
  func.func @transform_1(%arg0: i32) -> (i32, i32) {
    %c0_i32 = arith.constant 0 : i32
    %c0_i32_0 = arith.constant 0 : i32
    %c0_i32_1 = arith.constant 0 : i32
    return %c0_i32, %c0_i32_0 : i32, i32
  }
  func.func @transform_2(%arg0: i32) -> (i32, i32) {
    %c0_i32 = arith.constant 0 : i32
    %c0_i32_0 = arith.constant 0 : i32
    %c0_i32_1 = arith.constant 0 : i32
    return %c0_i32, %c0_i32_0 : i32, i32
  }
  func.func @transform_3(%arg0: i32) -> (i32, i32, i32) {
    %c0_i32 = arith.constant 0 : i32
    %c0_i32_0 = arith.constant 0 : i32
    %c0_i32_1 = arith.constant 0 : i32
    %c0_i32_2 = arith.constant 0 : i32
    return %c0_i32, %c0_i32_0, %c0_i32_1 : i32, i32, i32
  }
  func.func @transform_4(%arg0: i32) -> (i32, i32, i32) {
    %c0_i32 = arith.constant 0 : i32
    %c0_i32_0 = arith.constant 0 : i32
    %c0_i32_1 = arith.constant 0 : i32
    %c0_i32_2 = arith.constant 0 : i32
    return %c0_i32, %c0_i32_0, %c0_i32_1 : i32, i32, i32
  }
  func.func @transform_5(%arg0: i32) -> (i32, i32) {
    %c0_i32 = arith.constant 0 : i32
    %c0_i32_0 = arith.constant 0 : i32
    %c0_i32_1 = arith.constant 0 : i32
    return %c0_i32, %c0_i32_0 : i32, i32
  }
  func.func @transform_6(%arg0: i32) -> (i32, i32, i32) {
    %c0_i32 = arith.constant 0 : i32
    %c0_i32_0 = arith.constant 0 : i32
    %c0_i32_1 = arith.constant 0 : i32
    return %arg0, %c0_i32, %c0_i32_0 : i32, i32, i32
  }
}

</mosaic_0001>

<llo_original>
// kernel: tpu_custom_call.1
$region0: #{tpu_custom_call.1}
  #allocation0 [shape = 'u32[]', space=smem, size = 0x4, offset = 0x4, fixed_abs, tag = 'smem constant byte address 0x4 - core index']
  #allocation1 [shape = 'u32[72,128]{1,0:T(1,128)}', space=vmem, size = 0x9000, scoped, tag = 'internal scratch']
  %s0 = inlined_call_operand.vmem [shape: f32[2,8,32], index: 0, kind: input, shape index: {}]
  %s1 = inlined_call_operand.vmem [shape: f32[32,96], index: 1, kind: input, shape index: {}]
  %s2 = inlined_call_operand.vmem [shape: f32[32,32], index: 2, kind: input, shape index: {}]
  %s3 = inlined_call_operand.vmem [shape: f32[2,32,64], index: 3, kind: input, shape index: {}]
  %s4 = inlined_call_operand.vmem [shape: f32[2,64,32], index: 4, kind: input, shape index: {}]
  %s5 = inlined_call_operand.vmem [shape: f32[12,128], index: 5, kind: input, shape index: {}]
  %s6 = inlined_call_operand.hbm [shape: f32[2,8,32], index: 6, kind: output, shape index: {}]
  %s7 = sld [smem:[#allocation0]]
  $region34: #{tpu_custom_call.1} parent=0
    _
  %s9 = ssub.s32 1, %s7
  %s10 = scalar_select 0, %s9, %s7
  $region1: #{tpu_custom_call.1} parent=0
    #allocation2 [shape = 'u8[8192]{0}', space=vmem, size = 0x2000, scoped, tag = 'output window, operand 0, single buffered']
    #allocation3 [shape = 's32[1]{0}', space=sflag, size = 0x4, scoped, tag = 'scoped memory for tpu_custom_call.1']
    %11 = vsyncpa [#allocation3], 0
    // Predicated region
    $region2: #{tpu_custom_call.1} parent=1 // pred_check
      _
    $region3: #{tpu_custom_call.1} parent=1 // pred_check_branch
      %13 = sbr.rel (0) target = $region5
    $region4: #{tpu_custom_call.1} parent=1 // pred_region
      _
    $region5: #{tpu_custom_call.1} parent=1 // pred_fallthru
      _
    // Predicated region
    $region6: #{tpu_custom_call.1} parent=1 // pred_check
      _
    $region7: #{tpu_custom_call.1} parent=1 // pred_check_branch
      %15 = sbr.rel (0) target = $region9
    $region8: #{tpu_custom_call.1} parent=1 // pred_region
      _
    $region9: #{tpu_custom_call.1} parent=1 // pred_fallthru
      _
    // Predicated region
    $region10: #{tpu_custom_call.1} parent=1 // pred_check
      _
    $region11: #{tpu_custom_call.1} parent=1 // pred_check_branch
      %17 = sbr.rel (0) target = $region13
    $region12: #{tpu_custom_call.1} parent=1 // pred_region
      _
    $region13: #{tpu_custom_call.1} parent=1 // pred_fallthru
      _
    // Predicated region
    $region14: #{tpu_custom_call.1} parent=1 // pred_check
      _
    $region15: #{tpu_custom_call.1} parent=1 // pred_check_branch
      %19 = sbr.rel (0) target = $region17
    $region16: #{tpu_custom_call.1} parent=1 // pred_region
      _
    $region17: #{tpu_custom_call.1} parent=1 // pred_fallthru
      _
    // Predicated region
    $region18: #{tpu_custom_call.1} parent=1 // pred_check
      _
    $region19: #{tpu_custom_call.1} parent=1 // pred_check_branch
      %21 = sbr.rel (0) target = $region21
    $region20: #{tpu_custom_call.1} parent=1 // pred_region
      _
    $region21: #{tpu_custom_call.1} parent=1 // pred_fallthru
      _
    // Predicated region
    $region22: #{tpu_custom_call.1} parent=1 // pred_check
      _
    $region23: #{tpu_custom_call.1} parent=1 // pred_check_branch
      %23 = sbr.rel (0) target = $region25
    $region24: #{tpu_custom_call.1} parent=1 // pred_region
      _
    $region25: #{tpu_custom_call.1} parent=1 // pred_fallthru
      _
    %v24 = vld [vmem:[%s0] sm:$0xff]
    %v25 = vld [vmem:[%s0 + $0x8] sm:$0xff]
    %v26 = vld [vmem:[%s5] sm:$0xff]
    %v27 = vld [vmem:[%s5 + $0x8] sm:$0xf]
    %v28 = vld [vmem:[%s1] sm:$0xff]
    %v29 = vld [vmem:[%s1 + $0x8] sm:$0xff]
    %v30 = vld [vmem:[%s1 + $0x10] sm:$0xff]
    %v31 = vld [vmem:[%s1 + $0x18] sm:$0xff]
    %v32 = vperm.slane %v26, 0
    %vm33 = vcmask 261120
    %v35 = vsel %vm33, %v24, 0
    %v38 = vsel %vm33, %v25, 0
    %40 = vmatpush.msra.mxu0 0.0
    %41 = vmatpush.msra.mxu0 0.0
    %42 = vmatpush.msra.mxu0 0.0
    %43 = vmatpush.msra.mxu0 0.0
    %44 = vmatpush.msra.mxu0 0.0
    %45 = vmatpush.msra.mxu0 0.0
    %46 = vmatpush.msra.mxu0 0.0
    %47 = vmatpush.msra.mxu0 0.0
    %48 = vmatpush.msra.mxu0 0.0
    %49 = vmatpush.msra.mxu0 0.0
    %50 = vmatpush.msra.mxu0 0.0
    %51 = vmatpush.msra.mxu0 0.0
    %52 = vmatpush.msra.mxu0 %v31
    %53 = vmatpush.msra.mxu0 %v30
    %54 = vmatpush.msra.mxu0 %v29
    %55 = vmatpush.msra.mxu0 %v28
    %56 = vmatmul.f32.gmra.mxu0 %v35
    %v57 = vpop.f32.mrf.mxu0
    %v58 = vadd.f32 %v32, %v57
    %59 = vmatmul.f32.gmra.mxu0 %v38
    %v60 = vpop.f32.mrf.mxu0
    %v61 = vadd.f32 %v32, %v60
    %62 = vdwg.mxu0
    %64 = vrot.lane.b32.xlu0 %v58, 96
    %v65 = vpop.permute.xlu0 %64
    %vm66 = vcmask 64512
    %v67 = vsel %vm66, %v58, 0
    %v69 = vsel %vm66, %v65, 0
    %71 = vmatpush.xpose.msra.mxu0 0.0
    %72 = vmatpush.xpose.msra.mxu0 0.0
    %73 = vmatpush.xpose.msra.mxu0 0.0
    %74 = vmatpush.xpose.msra.mxu0 0.0
    %75 = vmatpush.xpose.msra.mxu0 0.0
    %76 = vmatpush.xpose.msra.mxu0 0.0
    %77 = vmatpush.xpose.msra.mxu0 0.0
    %78 = vmatpush.xpose.msra.mxu0 0.0
    %79 = vmatpush.xpose.msra.mxu0 0.0
    %80 = vmatpush.xpose.msra.mxu0 0.0
    %81 = vmatpush.xpose.msra.mxu0 0.0
    %82 = vmatpush.xpose.msra.mxu0 0.0
    %83 = vmatpush.xpose.msra.mxu0 0.0
    %84 = vmatpush.xpose.msra.mxu0 0.0
    %85 = vmatpush.xpose.msra.mxu0 0.0
    %86 = vmatpush.xpose.msra.mxu0 %v69
    %87 = vmatmul.f32.gmra.mxu0 %v67
    %v88 = vpop.f32.mrf.mxu0
    %v89 = vadd.f32 0.0, %v88
    %90 = vdwg.mxu0
    %92 = vrot.lane.b32.xlu0 %v61, 96
    %v93 = vpop.permute.xlu0 %92
    %v94 = vsel %vm66, %v61, 0
    %v96 = vsel %vm66, %v93, 0
    %98 = vmatpush.xpose.msra.mxu0 0.0
    %99 = vmatpush.xpose.msra.mxu0 0.0
    %100 = vmatpush.xpose.msra.mxu0 0.0
    %101 = vmatpush.xpose.msra.mxu0 0.0
    %102 = vmatpush.xpose.msra.mxu0 0.0
    %103 = vmatpush.xpose.msra.mxu0 0.0
    %104 = vmatpush.xpose.msra.mxu0 0.0
    %105 = vmatpush.xpose.msra.mxu0 0.0
    %106 = vmatpush.xpose.msra.mxu0 0.0
    %107 = vmatpush.xpose.msra.mxu0 0.0
    %108 = vmatpush.xpose.msra.mxu0 0.0
    %109 = vmatpush.xpose.msra.mxu0 0.0
    %110 = vmatpush.xpose.msra.mxu0 0.0
    %111 = vmatpush.xpose.msra.mxu0 0.0
    %112 = vmatpush.xpose.msra.mxu0 0.0
    %113 = vmatpush.xpose.msra.mxu0 %v96
    %114 = vmatmul.f32.gmra.mxu0 %v94
    %v115 = vpop.f32.mrf.mxu0
    %v116 = vadd.f32 0.0, %v115
    %117 = vdwg.mxu0
    %v118 = vsel %vm66, %v89, -inf
    %119 = vmax.xlane.f32.xlu0 %v118
    %v120 = vpop.xlane.xlu0 %119
    %v121 = vsel %vm66, %v116, -inf
    %122 = vmax.xlane.f32.xlu0 %v121
    %v123 = vpop.xlane.xlu0 %122
    %v124 = vsub.f32 %v89, %v120
    %v125 = vsub.f32 %v116, %v123
    %v126 = vmul.f32 %v124, 1.442695
    %v127 = vpow.pop %v126
    %v128 = vmul.f32 %v125, 1.442695
    %v129 = vpow.pop %v128
    %v130 = vsel %vm66, %v127, 0.0
    %131 = vadd.xlane.f32.xlu0 %v130
    %v132 = vpop.xlane.xlu0 %131
    %v133 = vsel %vm66, %v129, 0.0
    %134 = vadd.xlane.f32.xlu0 %v133
    %v135 = vpop.xlane.xlu0 %134
    %v136 = vrcp.pop %v132
    %v137 = vmul.f32 %v132, %v136
    %v138 = vsub.f32 1.0, %v137
    %v139 = vmul.f32 %v136, %v138
    %v140 = vadd.f32 %v136, %v139
    %vm141 = vweird.f32 %v132
    %vm142 = vweird.f32 %v136
    %vm143 = vmor %vm141, %vm142
    %v144 = vsel %vm143, %v136, %v140
    %v145 = vand.u32 2147483647, %v132
    %vm146 = vcmp.eq.f32.partialorder %v145, 8.507059e+37
    %v147 = vand.u32 %v132, 2147483648
    %v148 = vor.u32 1.1754944e-38, %v147
    %v149 = vsel %vm146, %v148, %v144
    %v150 = vrcp.pop %v135
    %v151 = vmul.f32 %v135, %v150
    %v152 = vsub.f32 1.0, %v151
    %v153 = vmul.f32 %v150, %v152
    %v154 = vadd.f32 %v150, %v153
    %vm155 = vweird.f32 %v135
    %vm156 = vweird.f32 %v150
    %vm157 = vmor %vm155, %vm156
    %v158 = vsel %vm157, %v150, %v154
    %v159 = vand.u32 2147483647, %v135
    %vm160 = vcmp.eq.f32.partialorder %v159, 8.507059e+37
    %v161 = vand.u32 %v135, 2147483648
    %v162 = vor.u32 1.1754944e-38, %v161
    %v163 = vsel %vm160, %v162, %v158
    %v164 = vmul.f32 %v127, %v149
    %v165 = vmul.f32 %v129, %v163
    %166 = vrot.lane.b32.xlu0 %v58, 64
    %v167 = vpop.permute.xlu0 %166
    %v170 = vsel %vm66, %v164, 0
    %172 = vmatpush.msra.mxu0 0.0
    %173 = vmatpush.msra.mxu0 0.0
    %174 = vmatpush.msra.mxu0 0.0
    %175 = vmatpush.msra.mxu0 0.0
    %176 = vmatpush.msra.mxu0 0.0
    %177 = vmatpush.msra.mxu0 0.0
    %178 = vmatpush.msra.mxu0 0.0
    %179 = vmatpush.msra.mxu0 0.0
    %180 = vmatpush.msra.mxu0 0.0
    %181 = vmatpush.msra.mxu0 0.0
    %182 = vmatpush.msra.mxu0 0.0
    %183 = vmatpush.msra.mxu0 0.0
    %184 = vmatpush.msra.mxu0 0.0
    %185 = vmatpush.msra.mxu0 0.0
    %186 = vmatpush.msra.mxu0 0.0
    %187 = vmatpush.msra.mxu0 %v167
    %188 = vmatmul.f32.gmra.mxu0 %v170
    %v189 = vpop.f32.mrf.mxu0
    %v190 = vadd.f32 0.0, %v189
    %191 = vdwg.mxu0
    %192 = vrot.lane.b32.xlu0 %v61, 64
    %v193 = vpop.permute.xlu0 %192
    %v196 = vsel %vm66, %v165, 0
    %198 = vmatpush.msra.mxu0 0.0
    %199 = vmatpush.msra.mxu0 0.0
    %200 = vmatpush.msra.mxu0 0.0
    %201 = vmatpush.msra.mxu0 0.0
    %202 = vmatpush.msra.mxu0 0.0
    %203 = vmatpush.msra.mxu0 0.0
    %204 = vmatpush.msra.mxu0 0.0
    %205 = vmatpush.msra.mxu0 0.0
    %206 = vmatpush.msra.mxu0 0.0
    %207 = vmatpush.msra.mxu0 0.0
    %208 = vmatpush.msra.mxu0 0.0
    %209 = vmatpush.msra.mxu0 0.0
    %210 = vmatpush.msra.mxu0 0.0
    %211 = vmatpush.msra.mxu0 0.0
    %212 = vmatpush.msra.mxu0 0.0
    %213 = vmatpush.msra.mxu0 %v193
    %214 = vmatmul.f32.gmra.mxu0 %v196
    %v215 = vpop.f32.mrf.mxu0
    %v216 = vadd.f32 0.0, %v215
    %217 = vdwg.mxu0
    %218 = vrot.lane.b32.xlu0 %v58, 120
    %v219 = vpop.permute.xlu0 %218
    %220 = vrot.lane.b32.xlu0 %v58, 88
    %v221 = vpop.permute.xlu0 %220
    %v222 = vsel %vm66, %v219, 0
    %v224 = vsel %vm66, %v221, 0
    %226 = vmatpush.xpose.msra.mxu0 0.0
    %227 = vmatpush.xpose.msra.mxu0 0.0
    %228 = vmatpush.xpose.msra.mxu0 0.0
    %229 = vmatpush.xpose.msra.mxu0 0.0
    %230 = vmatpush.xpose.msra.mxu0 0.0
    %231 = vmatpush.xpose.msra.mxu0 0.0
    %232 = vmatpush.xpose.msra.mxu0 0.0
    %233 = vmatpush.xpose.msra.mxu0 0.0
    %234 = vmatpush.xpose.msra.mxu0 0.0
    %235 = vmatpush.xpose.msra.mxu0 0.0
    %236 = vmatpush.xpose.msra.mxu0 0.0
    %237 = vmatpush.xpose.msra.mxu0 0.0
    %238 = vmatpush.xpose.msra.mxu0 0.0
    %239 = vmatpush.xpose.msra.mxu0 0.0
    %240 = vmatpush.xpose.msra.mxu0 0.0
    %241 = vmatpush.xpose.msra.mxu0 %v224
    %242 = vmatmul.f32.gmra.mxu0 %v222
    %v243 = vpop.f32.mrf.mxu0
    %v244 = vadd.f32 0.0, %v243
    %245 = vdwg.mxu0
    %246 = vrot.lane.b32.xlu0 %v61, 120
    %v247 = vpop.permute.xlu0 %246
    %248 = vrot.lane.b32.xlu0 %v61, 88
    %v249 = vpop.permute.xlu0 %248
    %v250 = vsel %vm66, %v247, 0
    %v252 = vsel %vm66, %v249, 0
    %254 = vmatpush.xpose.msra.mxu0 0.0
    %255 = vmatpush.xpose.msra.mxu0 0.0
    %256 = vmatpush.xpose.msra.mxu0 0.0
    %257 = vmatpush.xpose.msra.mxu0 0.0
    %258 = vmatpush.xpose.msra.mxu0 0.0
    %259 = vmatpush.xpose.msra.mxu0 0.0
    %260 = vmatpush.xpose.msra.mxu0 0.0
    %261 = vmatpush.xpose.msra.mxu0 0.0
    %262 = vmatpush.xpose.msra.mxu0 0.0
    %263 = vmatpush.xpose.msra.mxu0 0.0
    %264 = vmatpush.xpose.msra.mxu0 0.0
    %265 = vmatpush.xpose.msra.mxu0 0.0
    %266 = vmatpush.xpose.msra.mxu0 0.0
    %267 = vmatpush.xpose.msra.mxu0 0.0
    %268 = vmatpush.xpose.msra.mxu0 0.0
    %269 = vmatpush.xpose.msra.mxu0 %v252
    %270 = vmatmul.f32.gmra.mxu0 %v250
    %v271 = vpop.f32.mrf.mxu0
    %v272 = vadd.f32 0.0, %v271
    %273 = vdwg.mxu0
    %v274 = vsel %vm66, %v244, -inf
    %275 = vmax.xlane.f32.xlu0 %v274
    %v276 = vpop.xlane.xlu0 %275
    %v277 = vsel %vm66, %v272, -inf
    %278 = vmax.xlane.f32.xlu0 %v277
    %v279 = vpop.xlane.xlu0 %278
    %v280 = vsub.f32 %v244, %v276
    %v281 = vsub.f32 %v272, %v279
    %v282 = vmul.f32 %v280, 1.442695
    %v283 = vpow.pop %v282
    %v284 = vmul.f32 %v281, 1.442695
    %v285 = vpow.pop %v284
    %v286 = vsel %vm66, %v283, 0.0
    %287 = vadd.xlane.f32.xlu0 %v286
    %v288 = vpop.xlane.xlu0 %287
    %v289 = vsel %vm66, %v285, 0.0
    %290 = vadd.xlane.f32.xlu0 %v289
    %v291 = vpop.xlane.xlu0 %290
    %v292 = vrcp.pop %v288
    %v293 = vmul.f32 %v288, %v292
    %v294 = vsub.f32 1.0, %v293
    %v295 = vmul.f32 %v292, %v294
    %v296 = vadd.f32 %v292, %v295
    %vm297 = vweird.f32 %v288
    %vm298 = vweird.f32 %v292
    %vm299 = vmor %vm297, %vm298
    %v300 = vsel %vm299, %v292, %v296
    %v301 = vand.u32 2147483647, %v288
    %vm302 = vcmp.eq.f32.partialorder %v301, 8.507059e+37
    %v303 = vand.u32 %v288, 2147483648
    %v304 = vor.u32 1.1754944e-38, %v303
    %v305 = vsel %vm302, %v304, %v300
    %v306 = vrcp.pop %v291
    %v307 = vmul.f32 %v291, %v306
    %v308 = vsub.f32 1.0, %v307
    %v309 = vmul.f32 %v306, %v308
    %v310 = vadd.f32 %v306, %v309
    %vm311 = vweird.f32 %v291
    %vm312 = vweird.f32 %v306
    %vm313 = vmor %vm311, %vm312
    %v314 = vsel %vm313, %v306, %v310
    %v315 = vand.u32 2147483647, %v291
    %vm316 = vcmp.eq.f32.partialorder %v315, 8.507059e+37
    %v317 = vand.u32 %v291, 2147483648
    %v318 = vor.u32 1.1754944e-38, %v317
    %v319 = vsel %vm316, %v318, %v314
    %v320 = vmul.f32 %v283, %v305
    %v321 = vmul.f32 %v285, %v319
    %322 = vrot.lane.b32.xlu0 %v58, 56
    %v323 = vpop.permute.xlu0 %322
    %v326 = vsel %vm66, %v320, 0
    %328 = vmatpush.msra.mxu0 0.0
    %329 = vmatpush.msra.mxu0 0.0
    %330 = vmatpush.msra.mxu0 0.0
    %331 = vmatpush.msra.mxu0 0.0
    %332 = vmatpush.msra.mxu0 0.0
    %333 = vmatpush.msra.mxu0 0.0
    %334 = vmatpush.msra.mxu0 0.0
    %335 = vmatpush.msra.mxu0 0.0
    %336 = vmatpush.msra.mxu0 0.0
    %337 = vmatpush.msra.mxu0 0.0
    %338 = vmatpush.msra.mxu0 0.0
    %339 = vmatpush.msra.mxu0 0.0
    %340 = vmatpush.msra.mxu0 0.0
    %341 = vmatpush.msra.mxu0 0.0
    %342 = vmatpush.msra.mxu0 0.0
    %343 = vmatpush.msra.mxu0 %v323
    %344 = vmatmul.f32.gmra.mxu0 %v326
    %v345 = vpop.f32.mrf.mxu0
    %v346 = vadd.f32 0.0, %v345
    %347 = vdwg.mxu0
    %348 = vrot.lane.b32.xlu0 %v61, 56
    %v349 = vpop.permute.xlu0 %348
    %v352 = vsel %vm66, %v321, 0
    %354 = vmatpush.msra.mxu0 0.0
    %355 = vmatpush.msra.mxu0 0.0
    %356 = vmatpush.msra.mxu0 0.0
    %357 = vmatpush.msra.mxu0 0.0
    %358 = vmatpush.msra.mxu0 0.0
    %359 = vmatpush.msra.mxu0 0.0
    %360 = vmatpush.msra.mxu0 0.0
    %361 = vmatpush.msra.mxu0 0.0
    %362 = vmatpush.msra.mxu0 0.0
    %363 = vmatpush.msra.mxu0 0.0
    %364 = vmatpush.msra.mxu0 0.0
    %365 = vmatpush.msra.mxu0 0.0
    %366 = vmatpush.msra.mxu0 0.0
    %367 = vmatpush.msra.mxu0 0.0
    %368 = vmatpush.msra.mxu0 0.0
    %369 = vmatpush.msra.mxu0 %v349
    %370 = vmatmul.f32.gmra.mxu0 %v352
    %v371 = vpop.f32.mrf.mxu0
    %v372 = vadd.f32 0.0, %v371
    %373 = vdwg.mxu0
    %374 = vrot.lane.b32.xlu0 %v58, 112
    %v375 = vpop.permute.xlu0 %374
    %376 = vrot.lane.b32.xlu0 %v58, 80
    %v377 = vpop.permute.xlu0 %376
    %v378 = vsel %vm66, %v375, 0
    %v380 = vsel %vm66, %v377, 0
    %382 = vmatpush.xpose.msra.mxu0 0.0
    %383 = vmatpush.xpose.msra.mxu0 0.0
    %384 = vmatpush.xpose.msra.mxu0 0.0
    %385 = vmatpush.xpose.msra.mxu0 0.0
    %386 = vmatpush.xpose.msra.mxu0 0.0
    %387 = vmatpush.xpose.msra.mxu0 0.0
    %388 = vmatpush.xpose.msra.mxu0 0.0
    %389 = vmatpush.xpose.msra.mxu0 0.0
    %390 = vmatpush.xpose.msra.mxu0 0.0
    %391 = vmatpush.xpose.msra.mxu0 0.0
    %392 = vmatpush.xpose.msra.mxu0 0.0
    %393 = vmatpush.xpose.msra.mxu0 0.0
    %394 = vmatpush.xpose.msra.mxu0 0.0
    %395 = vmatpush.xpose.msra.mxu0 0.0
    %396 = vmatpush.xpose.msra.mxu0 0.0
    %397 = vmatpush.xpose.msra.mxu0 %v380
    %398 = vmatmul.f32.gmra.mxu0 %v378
    %v399 = vpop.f32.mrf.mxu0
    %v400 = vadd.f32 0.0, %v399
    %401 = vdwg.mxu0
    %402 = vrot.lane.b32.xlu0 %v61, 112
    %v403 = vpop.permute.xlu0 %402
    %404 = vrot.lane.b32.xlu0 %v61, 80
    %v405 = vpop.permute.xlu0 %404
    %v406 = vsel %vm66, %v403, 0
    %v408 = vsel %vm66, %v405, 0
    %410 = vmatpush.xpose.msra.mxu0 0.0
    %411 = vmatpush.xpose.msra.mxu0 0.0
    %412 = vmatpush.xpose.msra.mxu0 0.0
    %413 = vmatpush.xpose.msra.mxu0 0.0
    %414 = vmatpush.xpose.msra.mxu0 0.0
    %415 = vmatpush.xpose.msra.mxu0 0.0
    %416 = vmatpush.xpose.msra.mxu0 0.0
    %417 = vmatpush.xpose.msra.mxu0 0.0
    %418 = vmatpush.xpose.msra.mxu0 0.0
    %419 = vmatpush.xpose.msra.mxu0 0.0
    %420 = vmatpush.xpose.msra.mxu0 0.0
    %421 = vmatpush.xpose.msra.mxu0 0.0
    %422 = vmatpush.xpose.msra.mxu0 0.0
    %423 = vmatpush.xpose.msra.mxu0 0.0
    %424 = vmatpush.xpose.msra.mxu0 0.0
    %425 = vmatpush.xpose.msra.mxu0 %v408
    %426 = vmatmul.f32.gmra.mxu0 %v406
    %v427 = vpop.f32.mrf.mxu0
    %v428 = vadd.f32 0.0, %v427
    %429 = vdwg.mxu0
    %v430 = vsel %vm66, %v400, -inf
    %431 = vmax.xlane.f32.xlu0 %v430
    %v432 = vpop.xlane.xlu0 %431
    %v433 = vsel %vm66, %v428, -inf
    %434 = vmax.xlane.f32.xlu0 %v433
    %v435 = vpop.xlane.xlu0 %434
    %v436 = vsub.f32 %v400, %v432
    %v437 = vsub.f32 %v428, %v435
    %v438 = vmul.f32 %v436, 1.442695
    %v439 = vpow.pop %v438
    %v440 = vmul.f32 %v437, 1.442695
    %v441 = vpow.pop %v440
    %v442 = vsel %vm66, %v439, 0.0
    %443 = vadd.xlane.f32.xlu0 %v442
    %v444 = vpop.xlane.xlu0 %443
    %v445 = vsel %vm66, %v441, 0.0
    %446 = vadd.xlane.f32.xlu0 %v445
    %v447 = vpop.xlane.xlu0 %446
    %v448 = vrcp.pop %v444
    %v449 = vmul.f32 %v444, %v448
    %v450 = vsub.f32 1.0, %v449
    %v451 = vmul.f32 %v448, %v450
    %v452 = vadd.f32 %v448, %v451
    %vm453 = vweird.f32 %v444
    %vm454 = vweird.f32 %v448
    %vm455 = vmor %vm453, %vm454
    %v456 = vsel %vm455, %v448, %v452
    %v457 = vand.u32 2147483647, %v444
    %vm458 = vcmp.eq.f32.partialorder %v457, 8.507059e+37
    %v459 = vand.u32 %v444, 2147483648
    %v460 = vor.u32 1.1754944e-38, %v459
    %v461 = vsel %vm458, %v460, %v456
    %v462 = vrcp.pop %v447
    %v463 = vmul.f32 %v447, %v462
    %v464 = vsub.f32 1.0, %v463
    %v465 = vmul.f32 %v462, %v464
    %v466 = vadd.f32 %v462, %v465
    %vm467 = vweird.f32 %v447
    %vm468 = vweird.f32 %v462
    %vm469 = vmor %vm467, %vm468
    %v470 = vsel %vm469, %v462, %v466
    %v471 = vand.u32 2147483647, %v447
    %vm472 = vcmp.eq.f32.partialorder %v471, 8.507059e+37
    %v473 = vand.u32 %v447, 2147483648
    %v474 = vor.u32 1.1754944e-38, %v473
    %v475 = vsel %vm472, %v474, %v470
    %v476 = vmul.f32 %v439, %v461
    %v477 = vmul.f32 %v441, %v475
    %478 = vrot.lane.b32.xlu0 %v58, 48
    %v479 = vpop.permute.xlu0 %478
    %v482 = vsel %vm66, %v476, 0
    %484 = vmatpush.msra.mxu0 0.0
    %485 = vmatpush.msra.mxu0 0.0
    %486 = vmatpush.msra.mxu0 0.0
    %487 = vmatpush.msra.mxu0 0.0
    %488 = vmatpush.msra.mxu0 0.0
    %489 = vmatpush.msra.mxu0 0.0
    %490 = vmatpush.msra.mxu0 0.0
    %491 = vmatpush.msra.mxu0 0.0
    %492 = vmatpush.msra.mxu0 0.0
    %493 = vmatpush.msra.mxu0 0.0
    %494 = vmatpush.msra.mxu0 0.0
    %495 = vmatpush.msra.mxu0 0.0
    %496 = vmatpush.msra.mxu0 0.0
    %497 = vmatpush.msra.mxu0 0.0
    %498 = vmatpush.msra.mxu0 0.0
    %499 = vmatpush.msra.mxu0 %v479
    %500 = vmatmul.f32.gmra.mxu0 %v482
    %v501 = vpop.f32.mrf.mxu0
    %v502 = vadd.f32 0.0, %v501
    %503 = vdwg.mxu0
    %504 = vrot.lane.b32.xlu0 %v61, 48
    %v505 = vpop.permute.xlu0 %504
    %v508 = vsel %vm66, %v477, 0
    %510 = vmatpush.msra.mxu0 0.0
    %511 = vmatpush.msra.mxu0 0.0
    %512 = vmatpush.msra.mxu0 0.0
    %513 = vmatpush.msra.mxu0 0.0
    %514 = vmatpush.msra.mxu0 0.0
    %515 = vmatpush.msra.mxu0 0.0
    %516 = vmatpush.msra.mxu0 0.0
    %517 = vmatpush.msra.mxu0 0.0
    %518 = vmatpush.msra.mxu0 0.0
    %519 = vmatpush.msra.mxu0 0.0
    %520 = vmatpush.msra.mxu0 0.0
    %521 = vmatpush.msra.mxu0 0.0
    %522 = vmatpush.msra.mxu0 0.0
    %523 = vmatpush.msra.mxu0 0.0
    %524 = vmatpush.msra.mxu0 0.0
    %525 = vmatpush.msra.mxu0 %v505
    %526 = vmatmul.f32.gmra.mxu0 %v508
    %v527 = vpop.f32.mrf.mxu0
    %v528 = vadd.f32 0.0, %v527
    %529 = vdwg.mxu0
    %530 = vrot.lane.b32.xlu0 %v58, 104
    %v531 = vpop.permute.xlu0 %530
    %532 = vrot.lane.b32.xlu0 %v58, 72
    %v533 = vpop.permute.xlu0 %532
    %v534 = vsel %vm66, %v531, 0
    %v536 = vsel %vm66, %v533, 0
    %538 = vmatpush.xpose.msra.mxu0 0.0
    %539 = vmatpush.xpose.msra.mxu0 0.0
    %540 = vmatpush.xpose.msra.mxu0 0.0
    %541 = vmatpush.xpose.msra.mxu0 0.0
    %542 = vmatpush.xpose.msra.mxu0 0.0
    %543 = vmatpush.xpose.msra.mxu0 0.0
    %544 = vmatpush.xpose.msra.mxu0 0.0
    %545 = vmatpush.xpose.msra.mxu0 0.0
    %546 = vmatpush.xpose.msra.mxu0 0.0
    %547 = vmatpush.xpose.msra.mxu0 0.0
    %548 = vmatpush.xpose.msra.mxu0 0.0
    %549 = vmatpush.xpose.msra.mxu0 0.0
    %550 = vmatpush.xpose.msra.mxu0 0.0
    %551 = vmatpush.xpose.msra.mxu0 0.0
    %552 = vmatpush.xpose.msra.mxu0 0.0
    %553 = vmatpush.xpose.msra.mxu0 %v536
    %554 = vmatmul.f32.gmra.mxu0 %v534
    %v555 = vpop.f32.mrf.mxu0
    %v556 = vadd.f32 0.0, %v555
    %557 = vdwg.mxu0
    %558 = vrot.lane.b32.xlu0 %v61, 104
    %v559 = vpop.permute.xlu0 %558
    %560 = vrot.lane.b32.xlu0 %v61, 72
    %v561 = vpop.permute.xlu0 %560
    %v562 = vsel %vm66, %v559, 0
    %v564 = vsel %vm66, %v561, 0
    %566 = vmatpush.xpose.msra.mxu0 0.0
    %567 = vmatpush.xpose.msra.mxu0 0.0
    %568 = vmatpush.xpose.msra.mxu0 0.0
    %569 = vmatpush.xpose.msra.mxu0 0.0
    %570 = vmatpush.xpose.msra.mxu0 0.0
    %571 = vmatpush.xpose.msra.mxu0 0.0
    %572 = vmatpush.xpose.msra.mxu0 0.0
    %573 = vmatpush.xpose.msra.mxu0 0.0
    %574 = vmatpush.xpose.msra.mxu0 0.0
    %575 = vmatpush.xpose.msra.mxu0 0.0
    %576 = vmatpush.xpose.msra.mxu0 0.0
    %577 = vmatpush.xpose.msra.mxu0 0.0
    %578 = vmatpush.xpose.msra.mxu0 0.0
    %579 = vmatpush.xpose.msra.mxu0 0.0
    %580 = vmatpush.xpose.msra.mxu0 0.0
    %581 = vmatpush.xpose.msra.mxu0 %v564
    %582 = vmatmul.f32.gmra.mxu0 %v562
    %v583 = vpop.f32.mrf.mxu0
    %v584 = vadd.f32 0.0, %v583
    %585 = vdwg.mxu0
    %v586 = vsel %vm66, %v556, -inf
    %587 = vmax.xlane.f32.xlu0 %v586
    %v588 = vpop.xlane.xlu0 %587
    %v589 = vsel %vm66, %v584, -inf
    %590 = vmax.xlane.f32.xlu0 %v589
    %v591 = vpop.xlane.xlu0 %590
    %v592 = vsub.f32 %v556, %v588
    %v593 = vsub.f32 %v584, %v591
    %v594 = vmul.f32 %v592, 1.442695
    %v595 = vpow.pop %v594
    %v596 = vmul.f32 %v593, 1.442695
    %v597 = vpow.pop %v596
    %v598 = vsel %vm66, %v595, 0.0
    %599 = vadd.xlane.f32.xlu0 %v598
    %v600 = vpop.xlane.xlu0 %599
    %v601 = vsel %vm66, %v597, 0.0
    %602 = vadd.xlane.f32.xlu0 %v601
    %v603 = vpop.xlane.xlu0 %602
    %v604 = vrcp.pop %v600
    %v605 = vmul.f32 %v600, %v604
    %v606 = vsub.f32 1.0, %v605
    %v607 = vmul.f32 %v604, %v606
    %v608 = vadd.f32 %v604, %v607
    %vm609 = vweird.f32 %v600
    %vm610 = vweird.f32 %v604
    %vm611 = vmor %vm609, %vm610
    %v612 = vsel %vm611, %v604, %v608
    %v613 = vand.u32 2147483647, %v600
    %vm614 = vcmp.eq.f32.partialorder %v613, 8.507059e+37
    %v615 = vand.u32 %v600, 2147483648
    %v616 = vor.u32 1.1754944e-38, %v615
    %v617 = vsel %vm614, %v616, %v612
    %v618 = vrcp.pop %v603
    %v619 = vmul.f32 %v603, %v618
    %v620 = vsub.f32 1.0, %v619
    %v621 = vmul.f32 %v618, %v620
    %v622 = vadd.f32 %v618, %v621
    %vm623 = vweird.f32 %v603
    %vm624 = vweird.f32 %v618
    %vm625 = vmor %vm623, %vm624
    %v626 = vsel %vm625, %v618, %v622
    %v627 = vand.u32 2147483647, %v603
    %vm628 = vcmp.eq.f32.partialorder %v627, 8.507059e+37
    %v629 = vand.u32 %v603, 2147483648
    %v630 = vor.u32 1.1754944e-38, %v629
    %v631 = vsel %vm628, %v630, %v626
    %v632 = vmul.f32 %v595, %v617
    %v633 = vmul.f32 %v597, %v631
    %634 = vrot.lane.b32.xlu0 %v58, 40
    %v635 = vpop.permute.xlu0 %634
    %v638 = vsel %vm66, %v632, 0
    %640 = vmatpush.msra.mxu0 0.0
    %641 = vmatpush.msra.mxu0 0.0
    %642 = vmatpush.msra.mxu0 0.0
    %643 = vmatpush.msra.mxu0 0.0
    %644 = vmatpush.msra.mxu0 0.0
    %645 = vmatpush.msra.mxu0 0.0
    %646 = vmatpush.msra.mxu0 0.0
    %647 = vmatpush.msra.mxu0 0.0
    %648 = vmatpush.msra.mxu0 0.0
    %649 = vmatpush.msra.mxu0 0.0
    %650 = vmatpush.msra.mxu0 0.0
    %651 = vmatpush.msra.mxu0 0.0
    %652 = vmatpush.msra.mxu0 0.0
    %653 = vmatpush.msra.mxu0 0.0
    %654 = vmatpush.msra.mxu0 0.0
    %655 = vmatpush.msra.mxu0 %v635
    %656 = vmatmul.f32.gmra.mxu0 %v638
    %v657 = vpop.f32.mrf.mxu0
    %v658 = vadd.f32 0.0, %v657
    %659 = vdwg.mxu0
    %660 = vrot.lane.b32.xlu0 %v61, 40
    %v661 = vpop.permute.xlu0 %660
    %v664 = vsel %vm66, %v633, 0
    %666 = vmatpush.msra.mxu0 0.0
    %667 = vmatpush.msra.mxu0 0.0
    %668 = vmatpush.msra.mxu0 0.0
    %669 = vmatpush.msra.mxu0 0.0
    %670 = vmatpush.msra.mxu0 0.0
    %671 = vmatpush.msra.mxu0 0.0
    %672 = vmatpush.msra.mxu0 0.0
    %673 = vmatpush.msra.mxu0 0.0
    %674 = vmatpush.msra.mxu0 0.0
    %675 = vmatpush.msra.mxu0 0.0
    %676 = vmatpush.msra.mxu0 0.0
    %677 = vmatpush.msra.mxu0 0.0
    %678 = vmatpush.msra.mxu0 0.0
    %679 = vmatpush.msra.mxu0 0.0
    %680 = vmatpush.msra.mxu0 0.0
    %681 = vmatpush.msra.mxu0 %v661
    %682 = vmatmul.f32.gmra.mxu0 %v664
    %v683 = vpop.f32.mrf.mxu0
    %v684 = vadd.f32 0.0, %v683
    %685 = vdwg.mxu0
    %688 = vrot.lane.b32.xlu0 %v346, 8
    %v689 = vpop.permute.xlu0 %688
    %690 = vrot.lane.b32.xlu0 %v372, 8
    %v691 = vpop.permute.xlu0 %690
    %696 = vrot.lane.b32.xlu0 %v502, 16
    %v697 = vpop.permute.xlu0 %696
    %698 = vrot.lane.b32.xlu0 %v528, 16
    %v699 = vpop.permute.xlu0 %698
    %704 = vrot.lane.b32.xlu0 %v658, 24
    %v705 = vpop.permute.xlu0 %704
    %706 = vrot.lane.b32.xlu0 %v684, 24
    %v707 = vpop.permute.xlu0 %706
    %v710 = vsel %vm66, %v190, %v689
    %v711 = vsel %vm66, %v216, %v691
    %vm712 = vcmask 130048
    %v713 = vsel %vm712, %v710, %v697
    %v714 = vsel %vm712, %v711, %v699
    %vm715 = vcmask 195584
    %v716 = vsel %vm715, %v713, %v705
    %v717 = vsel %vm715, %v714, %v707
    %v718 = vld [vmem:[%s2] sm:$0xff]
    %v719 = vld [vmem:[%s2 + $0x8] sm:$0xff]
    %v720 = vld [vmem:[%s2 + $0x10] sm:$0xff]
    %v721 = vld [vmem:[%s2 + $0x18] sm:$0xff]
    %v722 = vperm.slane %v26, 1
    %v724 = vsel %vm33, %v716, 0
    %v727 = vsel %vm33, %v717, 0
    %729 = vmatpush.msra.mxu0 0.0
    %730 = vmatpush.msra.mxu0 0.0
    %731 = vmatpush.msra.mxu0 0.0
    %732 = vmatpush.msra.mxu0 0.0
    %733 = vmatpush.msra.mxu0 0.0
    %734 = vmatpush.msra.mxu0 0.0
    %735 = vmatpush.msra.mxu0 0.0
    %736 = vmatpush.msra.mxu0 0.0
    %737 = vmatpush.msra.mxu0 0.0
    %738 = vmatpush.msra.mxu0 0.0
    %739 = vmatpush.msra.mxu0 0.0
    %740 = vmatpush.msra.mxu0 0.0
    %741 = vmatpush.msra.mxu0 %v721
    %742 = vmatpush.msra.mxu0 %v720
    %743 = vmatpush.msra.mxu0 %v719
    %744 = vmatpush.msra.mxu0 %v718
    %745 = vmatmul.f32.gmra.mxu0 %v724
    %v746 = vpop.f32.mrf.mxu0
    %v747 = vadd.f32 %v722, %v746
    %748 = vmatmul.f32.gmra.mxu0 %v727
    %v749 = vpop.f32.mrf.mxu0
    %v750 = vadd.f32 %v722, %v749
    %751 = vdwg.mxu0
    %v752 = vadd.f32 %v24, %v747
    %v753 = vadd.f32 %v25, %v750
    %v754 = vsel %vm33, %v752, 0.0
    %755 = vadd.xlane.f32.xlu0 %v754
    %v756 = vpop.xlane.xlu0 %755
    %v757 = vsel %vm33, %v753, 0.0
    %758 = vadd.xlane.f32.xlu0 %v757
    %v759 = vpop.xlane.xlu0 %758
    %v760 = vrcp.pop 32.0
    %v761 = vmul.f32 32.0, %v760
    %v762 = vsub.f32 1.0, %v761
    %v763 = vmul.f32 %v760, %v762
    %v764 = vadd.f32 %v760, %v763
    %vm765 = vweird.f32 %v760
    %v766 = vsel %vm765, %v760, %v764
    %v767 = vmul.f32 %v756, %v766
    %v768 = vmul.f32 %v759, %v766
    %v769 = vsub.f32 %v752, %v767
    %v770 = vsub.f32 %v753, %v768
    %v771 = vmul.f32 %v769, %v769
    %v772 = vmul.f32 %v770, %v770
    %v773 = vsel %vm33, %v771, 0.0
    %774 = vadd.xlane.f32.xlu0 %v773
    %v775 = vpop.xlane.xlu0 %774
    %v776 = vsel %vm33, %v772, 0.0
    %777 = vadd.xlane.f32.xlu0 %v776
    %v778 = vpop.xlane.xlu0 %777
    %v779 = vmul.f32 %v775, %v766
    %v780 = vmul.f32 %v778, %v766
    %v781 = vadd.f32 %v779, 1e-05
    %v782 = vadd.f32 %v780, 1e-05
    %v783 = vrsqrt.pop %v781
    %v784 = vmul.f32 %v783, %v781
    %v785 = vmul.f32 %v784, %v783
    %v786 = vmul.f32 0.5, %v785
    %v787 = vsub.f32 1.5, %v786
    %v788 = vmul.f32 %v783, %v787
    %vm789 = vweird.f32 %v781
    %vm790 = vweird.f32 %v783
    %vm791 = vmor %vm789, %vm790
    %v792 = vsel %vm791, %v783, %v788
    %v793 = vrsqrt.pop %v782
    %v794 = vmul.f32 %v793, %v782
    %v795 = vmul.f32 %v794, %v793
    %v796 = vmul.f32 0.5, %v795
    %v797 = vsub.f32 1.5, %v796
    %v798 = vmul.f32 %v793, %v797
    %vm799 = vweird.f32 %v782
    %vm800 = vweird.f32 %v793
    %vm801 = vmor %vm799, %vm800
    %v802 = vsel %vm801, %v793, %v798
    %v803 = vmul.f32 %v769, %v792
    %v804 = vmul.f32 %v770, %v802
    %v805 = vperm.slane %v26, 2
    %v806 = vmul.f32 %v803, %v805
    %v807 = vmul.f32 %v804, %v805
    %v808 = vperm.slane %v26, 3
    %v809 = vadd.f32 %v806, %v808
    %v810 = vadd.f32 %v807, %v808
    %v811 = vld [vmem:[%s3] sm:$0xff]
    %v812 = vld [vmem:[%s3 + $0x8] sm:$0xff]
    %v813 = vld [vmem:[%s3 + $0x10] sm:$0xff]
    %v814 = vld [vmem:[%s3 + $0x18] sm:$0xff]
    %v815 = vperm.slane %v26, 4
    %v817 = vsel %vm33, %v809, 0
    %v820 = vsel %vm33, %v810, 0
    %822 = vmatpush.msra.mxu0 0.0
    %823 = vmatpush.msra.mxu0 0.0
    %824 = vmatpush.msra.mxu0 0.0
    %825 = vmatpush.msra.mxu0 0.0
    %826 = vmatpush.msra.mxu0 0.0
    %827 = vmatpush.msra.mxu0 0.0
    %828 = vmatpush.msra.mxu0 0.0
    %829 = vmatpush.msra.mxu0 0.0
    %830 = vmatpush.msra.mxu0 0.0
    %831 = vmatpush.msra.mxu0 0.0
    %832 = vmatpush.msra.mxu0 0.0
    %833 = vmatpush.msra.mxu0 0.0
    %834 = vmatpush.msra.mxu0 %v814
    %835 = vmatpush.msra.mxu0 %v813
    %836 = vmatpush.msra.mxu0 %v812
    %837 = vmatpush.msra.mxu0 %v811
    %838 = vmatmul.f32.gmra.mxu0 %v817
    %v839 = vpop.f32.mrf.mxu0
    %v840 = vadd.f32 %v815, %v839
    %841 = vmatmul.f32.gmra.mxu0 %v820
    %v842 = vpop.f32.mrf.mxu0
    %v843 = vadd.f32 %v815, %v842
    %844 = vdwg.mxu0
    %v845 = vmax.f32 %v840, 0.0
    %v846 = vmax.f32 %v843, 0.0
    %v847 = vld [vmem:[%s4] sm:$0xff]
    %v848 = vld [vmem:[%s4 + $0x8] sm:$0xff]
    %v849 = vld [vmem:[%s4 + $0x10] sm:$0xff]
    %v850 = vld [vmem:[%s4 + $0x18] sm:$0xff]
    %v851 = vld [vmem:[%s4 + $0x20] sm:$0xff]
    %v852 = vld [vmem:[%s4 + $0x28] sm:$0xff]
    %v853 = vld [vmem:[%s4 + $0x30] sm:$0xff]
    %v854 = vld [vmem:[%s4 + $0x38] sm:$0xff]
    %v855 = vperm.slane %v26, 5
    %vm856 = vcmask 523264
    %v858 = vsel %vm856, %v845, 0
    %v861 = vsel %vm856, %v846, 0
    %863 = vmatpush.msra.mxu0 0.0
    %864 = vmatpush.msra.mxu0 0.0
    %865 = vmatpush.msra.mxu0 0.0
    %866 = vmatpush.msra.mxu0 0.0
    %867 = vmatpush.msra.mxu0 0.0
    %868 = vmatpush.msra.mxu0 0.0
    %869 = vmatpush.msra.mxu0 0.0
    %870 = vmatpush.msra.mxu0 0.0
    %871 = vmatpush.msra.mxu0 %v854
    %872 = vmatpush.msra.mxu0 %v853
    %873 = vmatpush.msra.mxu0 %v852
    %874 = vmatpush.msra.mxu0 %v851
    %875 = vmatpush.msra.mxu0 %v850
    %876 = vmatpush.msra.mxu0 %v849
    %877 = vmatpush.msra.mxu0 %v848
    %878 = vmatpush.msra.mxu0 %v847
    %879 = vmatmul.f32.gmra.mxu0 %v858
    %v880 = vpop.f32.mrf.mxu0
    %v881 = vadd.f32 %v855, %v880
    %882 = vmatmul.f32.gmra.mxu0 %v861
    %v883 = vpop.f32.mrf.mxu0
    %v884 = vadd.f32 %v855, %v883
    %885 = vdwg.mxu0
    %v886 = vadd.f32 %v809, %v881
    %v887 = vadd.f32 %v810, %v884
    %v888 = vsel %vm33, %v886, 0.0
    %889 = vadd.xlane.f32.xlu0 %v888
    %v890 = vpop.xlane.xlu0 %889
    %v891 = vsel %vm33, %v887, 0.0
    %892 = vadd.xlane.f32.xlu0 %v891
    %v893 = vpop.xlane.xlu0 %892
    %v894 = vmul.f32 %v890, %v766
    %v895 = vmul.f32 %v893, %v766
    %v896 = vsub.f32 %v886, %v894
    %v897 = vsub.f32 %v887, %v895
    %v898 = vmul.f32 %v896, %v896
    %v899 = vmul.f32 %v897, %v897
    %v900 = vsel %vm33, %v898, 0.0
    %901 = vadd.xlane.f32.xlu0 %v900
    %v902 = vpop.xlane.xlu0 %901
    %v903 = vsel %vm33, %v899, 0.0
    %904 = vadd.xlane.f32.xlu0 %v903
    %v905 = vpop.xlane.xlu0 %904
    %v906 = vmul.f32 %v902, %v766
    %v907 = vmul.f32 %v905, %v766
    %v908 = vadd.f32 %v906, 1e-05
    %v909 = vadd.f32 %v907, 1e-05
    %v910 = vrsqrt.pop %v908
    %v911 = vmul.f32 %v910, %v908
    %v912 = vmul.f32 %v911, %v910
    %v913 = vmul.f32 0.5, %v912
    %v914 = vsub.f32 1.5, %v913
    %v915 = vmul.f32 %v910, %v914
    %vm916 = vweird.f32 %v908
    %vm917 = vweird.f32 %v910
    %vm918 = vmor %vm916, %vm917
    %v919 = vsel %vm918, %v910, %v915
    %v920 = vrsqrt.pop %v909
    %v921 = vmul.f32 %v920, %v909
    %v922 = vmul.f32 %v921, %v920
    %v923 = vmul.f32 0.5, %v922
    %v924 = vsub.f32 1.5, %v923
    %v925 = vmul.f32 %v920, %v924
    %vm926 = vweird.f32 %v909
    %vm927 = vweird.f32 %v920
    %vm928 = vmor %vm926, %vm927
    %v929 = vsel %vm928, %v920, %v925
    %v930 = vmul.f32 %v896, %v919
    %v931 = vmul.f32 %v897, %v929
    %v932 = vperm.slane %v26, 6
    %v933 = vmul.f32 %v930, %v932
    %v934 = vmul.f32 %v931, %v932
    %v935 = vperm.slane %v26, 7
    %v936 = vadd.f32 %v933, %v935
    %v937 = vadd.f32 %v934, %v935
    %s938 = scalar_lea.vmem %s3, 32
    %v939 = vld [vmem:[%s938] sm:$0xff]
    %v940 = vld [vmem:[%s938 + $0x8] sm:$0xff]
    %v941 = vld [vmem:[%s938 + $0x10] sm:$0xff]
    %v942 = vld [vmem:[%s938 + $0x18] sm:$0xff]
    %v943 = vperm.slane %v27, 0
    %v945 = vsel %vm33, %v936, 0
    %v948 = vsel %vm33, %v937, 0
    %950 = vmatpush.msra.mxu0 0.0
    %951 = vmatpush.msra.mxu0 0.0
    %952 = vmatpush.msra.mxu0 0.0
    %953 = vmatpush.msra.mxu0 0.0
    %954 = vmatpush.msra.mxu0 0.0
    %955 = vmatpush.msra.mxu0 0.0
    %956 = vmatpush.msra.mxu0 0.0
    %957 = vmatpush.msra.mxu0 0.0
    %958 = vmatpush.msra.mxu0 0.0
    %959 = vmatpush.msra.mxu0 0.0
    %960 = vmatpush.msra.mxu0 0.0
    %961 = vmatpush.msra.mxu0 0.0
    %962 = vmatpush.msra.mxu0 %v942
    %963 = vmatpush.msra.mxu0 %v941
    %964 = vmatpush.msra.mxu0 %v940
    %965 = vmatpush.msra.mxu0 %v939
    %966 = vmatmul.f32.gmra.mxu0 %v945
    %v967 = vpop.f32.mrf.mxu0
    %v968 = vadd.f32 %v943, %v967
    %969 = vmatmul.f32.gmra.mxu0 %v948
    %v970 = vpop.f32.mrf.mxu0
    %v971 = vadd.f32 %v943, %v970
    %972 = vdwg.mxu0
    %v973 = vmax.f32 %v968, 0.0
    %v974 = vmax.f32 %v971, 0.0
    %s975 = scalar_lea.vmem %s4, 64
    %v976 = vld [vmem:[%s975] sm:$0xff]
    %v977 = vld [vmem:[%s975 + $0x8] sm:$0xff]
    %v978 = vld [vmem:[%s975 + $0x10] sm:$0xff]
    %v979 = vld [vmem:[%s975 + $0x18] sm:$0xff]
    %v980 = vld [vmem:[%s975 + $0x20] sm:$0xff]
    %v981 = vld [vmem:[%s975 + $0x28] sm:$0xff]
    %v982 = vld [vmem:[%s975 + $0x30] sm:$0xff]
    %v983 = vld [vmem:[%s975 + $0x38] sm:$0xff]
    %v984 = vperm.slane %v27, 1
    %v986 = vsel %vm856, %v973, 0
    %v989 = vsel %vm856, %v974, 0
    %991 = vmatpush.msra.mxu0 0.0
    %992 = vmatpush.msra.mxu0 0.0
    %993 = vmatpush.msra.mxu0 0.0
    %994 = vmatpush.msra.mxu0 0.0
    %995 = vmatpush.msra.mxu0 0.0
    %996 = vmatpush.msra.mxu0 0.0
    %997 = vmatpush.msra.mxu0 0.0
    %998 = vmatpush.msra.mxu0 0.0
    %999 = vmatpush.msra.mxu0 %v983
    %1000 = vmatpush.msra.mxu0 %v982
    %1001 = vmatpush.msra.mxu0 %v981
    %1002 = vmatpush.msra.mxu0 %v980
    %1003 = vmatpush.msra.mxu0 %v979
    %1004 = vmatpush.msra.mxu0 %v978
    %1005 = vmatpush.msra.mxu0 %v977
    %1006 = vmatpush.msra.mxu0 %v976
    %1007 = vmatmul.f32.gmra.mxu0 %v986
    %v1008 = vpop.f32.mrf.mxu0
    %v1009 = vadd.f32 %v984, %v1008
    %1010 = vmatmul.f32.gmra.mxu0 %v989
    %v1011 = vpop.f32.mrf.mxu0
    %v1012 = vadd.f32 %v984, %v1011
    %1013 = vdwg.mxu0
    %v1014 = vadd.f32 %v936, %v1009
    %v1015 = vadd.f32 %v937, %v1012
    %v1016 = vsel %vm33, %v1014, 0.0
    %1017 = vadd.xlane.f32.xlu0 %v1016
    %v1018 = vpop.xlane.xlu0 %1017
    %v1019 = vsel %vm33, %v1015, 0.0
    %1020 = vadd.xlane.f32.xlu0 %v1019
    %v1021 = vpop.xlane.xlu0 %1020
    %v1022 = vmul.f32 %v1018, %v766
    %v1023 = vmul.f32 %v1021, %v766
    %v1024 = vsub.f32 %v1014, %v1022
    %v1025 = vsub.f32 %v1015, %v1023
    %v1026 = vmul.f32 %v1024, %v1024
    %v1027 = vmul.f32 %v1025, %v1025
    %v1028 = vsel %vm33, %v1026, 0.0
    %1029 = vadd.xlane.f32.xlu0 %v1028
    %v1030 = vpop.xlane.xlu0 %1029
    %v1031 = vsel %vm33, %v1027, 0.0
    %1032 = vadd.xlane.f32.xlu0 %v1031
    %v1033 = vpop.xlane.xlu0 %1032
    %v1034 = vmul.f32 %v1030, %v766
    %v1035 = vmul.f32 %v1033, %v766
    %v1036 = vadd.f32 %v1034, 1e-05
    %v1037 = vadd.f32 %v1035, 1e-05
    %v1038 = vrsqrt.pop %v1036
    %v1039 = vmul.f32 %v1038, %v1036
    %v1040 = vmul.f32 %v1039, %v1038
    %v1041 = vmul.f32 0.5, %v1040
    %v1042 = vsub.f32 1.5, %v1041
    %v1043 = vmul.f32 %v1038, %v1042
    %vm1044 = vweird.f32 %v1036
    %vm1045 = vweird.f32 %v1038
    %vm1046 = vmor %vm1044, %vm1045
    %v1047 = vsel %vm1046, %v1038, %v1043
    %v1048 = vrsqrt.pop %v1037
    %v1049 = vmul.f32 %v1048, %v1037
    %v1050 = vmul.f32 %v1049, %v1048
    %v1051 = vmul.f32 0.5, %v1050
    %v1052 = vsub.f32 1.5, %v1051
    %v1053 = vmul.f32 %v1048, %v1052
    %vm1054 = vweird.f32 %v1037
    %vm1055 = vweird.f32 %v1048
    %vm1056 = vmor %vm1054, %vm1055
    %v1057 = vsel %vm1056, %v1048, %v1053
    %v1058 = vmul.f32 %v1024, %v1047
    %v1059 = vmul.f32 %v1025, %v1057
    %v1060 = vperm.slane %v27, 2
    %v1061 = vmul.f32 %v1058, %v1060
    %v1062 = vmul.f32 %v1059, %v1060
    %v1063 = vperm.slane %v27, 3
    %v1064 = vadd.f32 %v1061, %v1063
    %v1065 = vadd.f32 %v1062, %v1063
    %1066 = vst.msk [vmem:[#allocation2] sm:$0xff] %vm33, %v1064
    %1067 = vst.msk [vmem:[#allocation2 + $0x8] sm:$0xff] %vm33, %v1065
    // Predicated region
    $region26: #{tpu_custom_call.1} parent=1 // pred_check
      _
    $region27: #{tpu_custom_call.1} parent=1 // pred_check_branch
      %1069 = sbr.rel (0) target = $region29
    $region28: #{tpu_custom_call.1} parent=1 // pred_region
      %1071 = vsyncadd [#allocation3], 0
      %s1072 = sshll.u32 [#allocation2], 4
      %s1073 = int_to_ptr.vmem [resolvable:$true] %s1072
      %s1074 = sshll.u32 %s6, 4
      %s1075 = int_to_ptr.hbm [resolvable:$true] %s1074
      %1080 = dma.vmem_to_hbm [thread:$0]  %s1073, 256, %s1075, [#allocation3], 128, 128, 8
    $region29: #{tpu_custom_call.1} parent=1 // pred_fallthru
      _
    // Predicated region
    $region30: #{tpu_custom_call.1} parent=1 // pred_check
      _
    $region31: #{tpu_custom_call.1} parent=1 // pred_check_branch
      %1082 = sbr.rel (0) target = $region33
    $region32: #{tpu_custom_call.1} parent=1 // pred_region
      %1084 = dma.done [#allocation3], 256
    $region33: #{tpu_custom_call.1} parent=1 // pred_fallthru
      _
    %1085 = vsyncpa [#allocation3], 1

</llo_original>
